<compile_context>
chip_gen: v7x
topology: tpu7x:2x2x1
jax: 0.10.0
libtpu: 0.0.40
codegen_flags: <defaults>
</compile_context>

<pallas_src>
import functools
import re

import jax
import jax.numpy as jnp
from jax.experimental import pallas as pl
from jax.experimental.pallas import tpu as pltpu

D_MODEL = 64
N_HEADS = 2
N_LAYERS = 2
D_FF = 128
EPS = 1e-5  # nn.LayerNorm default


# ----------------------------------------------------------------------------- kernel
def _layernorm_cols(x, g, b):
    """LayerNorm over d_model, which is axis 0 in the transposed (d, tn) layout."""
    mu = jnp.mean(x, axis=0, keepdims=True)
    var = jnp.mean((x - mu) ** 2, axis=0, keepdims=True)
    return (x - mu) * jax.lax.rsqrt(var + EPS) * g + b


def transformer_kernel(x_ref, we_ref, be_ref, wvo_ref, w1_ref, b1_ref,
                       w2_ref, ln_ref, wgc_ref, cfc_ref, o_ref, *, relu_bf16):
    # ln_ref[l, j] column order: 0=bvo, 1=b2, 2=ln1 gamma, 3=ln1 beta,
    #                            4=ln2 gamma, 5=ln2 beta          (each (d, 1))
    bf = jnp.bfloat16

    # embed: (d, in) @ (in, tn) -> h^T (d, tn), f32 accumulation.  x is already
    # bf16 (cast fused into the wrapper's transpose/pad pass).
    h = jnp.dot(we_ref[...], x_ref[...],
                preferred_element_type=jnp.float32) + be_ref[...]

    for l in range(N_LAYERS):  # static unroll over the 2 encoder layers
        bvo = ln_ref[l, 0]
        b2 = ln_ref[l, 1]
        g1 = ln_ref[l, 2]
        bt1 = ln_ref[l, 3]

        # --- self-attention block (seq_len == 1 => attn = out_proj(V)),
        #     V-proj and out-proj fused into one matmul: Wvo @ h^T + bvo. ---
        attn = jnp.dot(wvo_ref[l], h.astype(bf),
                       preferred_element_type=jnp.float32) + bvo
        h = _layernorm_cols(h + attn, g1, bt1)

        # --- feed-forward block (relu activation, post-norm) ---
        ff = jnp.dot(w1_ref[l], h.astype(bf),
                     preferred_element_type=jnp.float32) + b1_ref[l]
        if relu_bf16:
            # v6e/v7x: bf16 VALU packs 2x elements; relu(cast(x)) == cast(relu(x))
            ff = jnp.maximum(ff.astype(bf), 0.0)
        else:
            # v5e: no bf16 VALU -> keep elementwise math f32
            ff = jnp.maximum(ff, 0.0).astype(bf)
        z = h + jnp.dot(w2_ref[l], ff,
                        preferred_element_type=jnp.float32) + b2

        if l < N_LAYERS - 1:
            h = _layernorm_cols(z, ln_ref[l, 4], ln_ref[l, 5])
        else:
            # Final LayerNorm folded into the fc head (it feeds only the fc):
            #   out = rsqrt(var(z)+eps) * sum_d(z * wgc) + cfc
            mu = jnp.mean(z, axis=0, keepdims=True)
            var = jnp.mean((z - mu) ** 2, axis=0, keepdims=True)
            s = jnp.sum(z * wgc_ref[...], axis=0, keepdims=True)
            o_ref[...] = jax.lax.rsqrt(var + EPS) * s + cfc_ref[...]


# ----------------------------------------------------------------------------- wrapper
def _cdiv(a, b):
    return (a + b - 1) // b


def _tpu_generation():
    """Best-effort TPU generation from device_kind (e.g. 'TPU v5 lite' -> 5)."""
    try:
        kind = jax.devices()[0].device_kind.lower()
    except Exception:
        return None
    m = re.search(r"(\d+)", kind)
    return int(m.group(1)) if m else None


def transformer_forward(x, kp, *, tn=None):
    N, input_dim = x.shape

    gen = _tpu_generation()
    relu_bf16 = (gen is None) or (gen >= 6)   # v5e & older: no bf16 VALU
    tn_cap = 2048 if relu_bf16 else 512       # v5e: single vst slot -> smaller tiles

    if tn is None:
        n128 = _cdiv(N, 128)
        if n128 <= 1:
            tn, ntiles = N, 1                 # tiny batch: one grid step
        else:
            # >= 2 lane-aligned tiles with an even tile count (v7x megacore
            # balance), each as large as the cap allows so the ~600-cycle
            # per-step overhead is amortised.
            ntiles = max(2, _cdiv(n128, tn_cap // 128))
            ntiles += ntiles % 2
            tn = 128 * _cdiv(n128, ntiles)
    else:
        if tn >= N:
            tn, ntiles = N, 1
        else:
            tn = max(128, (tn // 128) * 128)
            ntiles = _cdiv(N, tn)
    Np = tn * ntiles

    # Single fused pass over x: bf16 cast + transpose + pad (XLA fuses these).
    # Padded lanes are junk-but-finite and dropped after the kernel.
    xb = x.astype(jnp.bfloat16).T
    if Np != N:
        xb = jnp.pad(xb, ((0, 0), (0, Np - N)))

    def full(shape):
        nd = len(shape)
        return pl.BlockSpec(shape, lambda i, _nd=nd: (0,) * _nd)

    in_specs = [
        pl.BlockSpec((input_dim, tn), lambda i: (0, i)),   # x^T tile (lanes = batch)
        full((D_MODEL, input_dim)),                        # We   (bf16)
        full((D_MODEL, 1)),                                # be column
        full((N_LAYERS, D_MODEL, D_MODEL)),                # Wvo = Wo @ Wv (bf16)
        full((N_LAYERS, D_FF, D_MODEL)),                   # W1   (bf16)
        full((N_LAYERS, D_FF, 1)),                         # b1 column
        full((N_LAYERS, D_MODEL, D_FF)),                   # W2   (bf16)
        full((N_LAYERS, 6, D_MODEL, 1)),                   # packed bias/LN slab
        full((D_MODEL, 1)),                                # wgc column (LN-folded fc)
        full((1, 1)),                                      # cfc scalar
    ]

    out = pl.pallas_call(
        functools.partial(transformer_kernel, relu_bf16=relu_bf16),
        out_shape=jax.ShapeDtypeStruct((1, Np), jnp.float32),
        grid=(ntiles,),
        in_specs=in_specs,
        out_specs=pl.BlockSpec((1, tn), lambda i: (0, i)),  # lane-dense output
        compiler_params=pltpu.CompilerParams(
            dimension_semantics=("parallel",)),
    )(xb, kp["we"], kp["be"], kp["wvo"], kp["w1"], kp["b1"],
      kp["w2"], kp["ln"], kp["wgc"], kp["cfc"])

    return out[0, :N]  # drop padding; matches PyTorch .squeeze(-1)


# ----------------------------------------------------------------------------- params
def init_params(input_dim, key):
    """Raw parameters in PyTorch (out, in) layout."""
    ks = jax.random.split(key, 20)
    s = 0.1
    n = lambda k, shape: s * jax.random.normal(k, shape, jnp.float32)
    L, D, F = N_LAYERS, D_MODEL, D_FF
    return {
        "We": n(ks[0], (D, input_dim)), "be": n(ks[1], (D,)),
        "Wq": n(ks[2], (L, D, D)), "bq": n(ks[3], (L, D)),
        "Wk": n(ks[4], (L, D, D)), "bk": n(ks[5], (L, D)),
        "Wv": n(ks[6], (L, D, D)), "bv": n(ks[7], (L, D)),
        "Wo": n(ks[8], (L, D, D)), "bo": n(ks[9], (L, D)),
        "W1": n(ks[10], (L, F, D)), "b1": n(ks[11], (L, F)),
        "W2": n(ks[12], (L, D, F)), "b2": n(ks[13], (L, D)),
        "g1": 1.0 + n(ks[14], (L, D)), "bt1": n(ks[15], (L, D)),
        "g2": 1.0 + n(ks[16], (L, D)), "bt2": n(ks[17], (L, D)),
        "Wfc": n(ks[18], (1, D)), "bfc": n(ks[19], (1,)),
    }


def pack_params(rp):
    """Kernel-ready params: fused attention, bf16 matmul weights, packed biases,
    and the final-LayerNorm-into-fc fold."""
    wvo = jnp.einsum("lij,ljk->lik", rp["Wo"], rp["Wv"])              # Wo @ Wv
    bvo = jnp.einsum("lij,lj->li", rp["Wo"], rp["bv"]) + rp["bo"]     # Wo @ bv + bo
    ln = jnp.stack([bvo, rp["b2"], rp["g1"], rp["bt1"], rp["g2"], rp["bt2"]],
                   axis=1)                                            # (L, 6, D)
    # Fold the last layer's LayerNorm into the fc head:
    #   out = rsqrt(var(z)+eps) * (wgc . z) + cfc
    wfc = rp["Wfc"][0]
    wg = wfc * rp["g2"][-1]
    wgc = wg - jnp.mean(wg)
    cfc = jnp.sum(wfc * rp["bt2"][-1]) + rp["bfc"][0]
    return {
        "we":  rp["We"].astype(jnp.bfloat16),
        "be":  rp["be"].reshape(D_MODEL, 1),
        "wvo": wvo.astype(jnp.bfloat16),
        "w1":  rp["W1"].astype(jnp.bfloat16),
        "b1":  rp["b1"].reshape(N_LAYERS, D_FF, 1),
        "w2":  rp["W2"].astype(jnp.bfloat16),
        "ln":  ln.reshape(N_LAYERS, 6, D_MODEL, 1),
        "wgc": wgc.reshape(D_MODEL, 1),
        "cfc": cfc.reshape(1, 1),
    }


# ----------------------------------------------------------------------------- references
def _ln_rows(x, g, b):
    mu = jnp.mean(x, axis=-1, keepdims=True)
    var = jnp.mean((x - mu) ** 2, axis=-1, keepdims=True)
    return (x - mu) * jax.lax.rsqrt(var + EPS) * g + b


def reference_forward(x, rp):
    """Full-precision pure-JAX reference with the complete multi-head attention
    math (Q/K, scaling, softmax) — validates the seq_len=1 + fusion reduction."""
    N = x.shape[0]
    hd = D_MODEL // N_HEADS
    h = x @ rp["We"].T + rp["be"]
    for l in range(N_LAYERS):
        q = h @ rp["Wq"][l].T + rp["bq"][l]
        k = h @ rp["Wk"][l].T + rp["bk"][l]
        v = h @ rp["Wv"][l].T + rp["bv"][l]
        qh = q.reshape(N, N_HEADS, hd)
        kh = k.reshape(N, N_HEADS, hd)
        vh = v.reshape(N, N_HEADS, hd)
        scores = jnp.einsum("nhd,nhd->nh", qh, kh) / jnp.sqrt(float(hd))
        w = jax.nn.softmax(scores[..., None], axis=-1)   # seq dim of size 1 -> 1.0
        attn = (w * vh).reshape(N, D_MODEL) @ rp["Wo"][l].T + rp["bo"][l]
        h = _ln_rows(h + attn, rp["g1"][l], rp["bt1"][l])
        ff = jax.nn.relu(h @ rp["W1"][l].T + rp["b1"][l]) @ rp["W2"][l].T + rp["b2"][l]
        h = _ln_rows(h + ff, rp["g2"][l], rp["bt2"][l])
    return (h @ rp["Wfc"].T + rp["bfc"])[:, 0]


def fused_reference_rows(x, kp):
    """Row-layout mirror of the exact kernel math (fused Wvo, bf16 matmul
    operands, f32 accumulation, LN-folded fc) — tight-tolerance kernel check."""
    bf = jnp.bfloat16

    def mm(a, w):  # a: (N, in) f32, w: (out, in) bf16 -> (N, out) f32
        return jnp.dot(a.astype(bf), w.T, preferred_element_type=jnp.float32)

    ln = kp["ln"][..., 0]                       # (L, 6, D)
    h = mm(x, kp["we"]) + kp["be"][:, 0]
    out = None
    for l in range(N_LAYERS):
        bvo, b2, g1, bt1, g2, bt2 = (ln[l, j] for j in range(6))
        h = _ln_rows(h + mm(h, kp["wvo"][l]) + bvo, g1, bt1)
        ff = jax.nn.relu(mm(h, kp["w1"][l]) + kp["b1"][l, :, 0])
        z = h + mm(ff, kp["w2"][l]) + b2
        if l < N_LAYERS - 1:
            h = _ln_rows(z, g2, bt2)
        else:
            mu = jnp.mean(z, axis=-1, keepdims=True)
            var = jnp.mean((z - mu) ** 2, axis=-1, keepdims=True)
            s = jnp.sum(z * kp["wgc"][:, 0], axis=-1, keepdims=True)
            out = jax.lax.rsqrt(var + EPS) * s + kp["cfc"][0, 0]
    return out[:, 0]


# ----------------------------------------------------------------------------- main
if __name__ == "__main__":
    key = jax.random.PRNGKey(0)
    kx, kx2, kparam = jax.random.split(key, 3)

    INPUT_DIM = 16
    raw = init_params(INPUT_DIM, kparam)
    packed = pack_params(raw)

    def check(x):
        out = jax.block_until_ready(transformer_forward(x, packed))
        assert out.shape == (x.shape[0],), out.shape

        # 1) exact-math check against a row-layout mirror of the kernel (bf16 ops)
        ref_fused = fused_reference_rows(x, packed)
        if not jnp.allclose(out, ref_fused, atol=1e-3, rtol=1e-3):
            raise AssertionError(
                "kernel vs fused bf16 mirror mismatch: "
                f"{jnp.max(jnp.abs(out - ref_fused))}")

        # 2) end-to-end check against full-precision full-attention reference
        #    (loose tolerance accounts for bf16 matmul-operand rounding)
        ref_full = reference_forward(x, raw)
        if not jnp.allclose(out, ref_full, atol=5e-2, rtol=5e-2):
            raise AssertionError(
                "kernel vs f32 full-attention reference mismatch: "
                f"{jnp.max(jnp.abs(out - ref_full))}")

    # small batch: single-grid-step path
    check(jax.random.normal(kx, (16, INPUT_DIM), jnp.float32))
    # larger batch: exercises lane-aligned tiling, padding and the even
    # (>= 2-tile) "parallel" grid used for multi-TensorCore chips.
    check(jax.random.normal(kx2, (300, INPUT_DIM), jnp.float32))

    print("KERNEL_OK")
</pallas_src>

<mosaic_0001>
module attributes {stable_mosaic.version = 11 : i64} {
  func.func @transformer_kernel(%arg0: i32, %arg1: memref<16x16xbf16, #tpu.memory_space<vmem>>, %arg2: memref<64x16xbf16, #tpu.memory_space<vmem>>, %arg3: memref<64x1xf32, #tpu.memory_space<vmem>>, %arg4: memref<2x64x64xbf16, #tpu.memory_space<vmem>>, %arg5: memref<2x128x64xbf16, #tpu.memory_space<vmem>>, %arg6: memref<2x128x1xf32, #tpu.memory_space<vmem>>, %arg7: memref<2x64x128xbf16, #tpu.memory_space<vmem>>, %arg8: memref<2x6x64x1xf32, #tpu.memory_space<vmem>>, %arg9: memref<64x1xf32, #tpu.memory_space<vmem>>, %arg10: memref<1x1xf32, #tpu.memory_space<vmem>>, %arg11: memref<1x16xf32, #tpu.memory_space<vmem>>) attributes {dimension_semantics = [#tpu.dimension_semantics<parallel>], iteration_bounds = array<i64: 1>, scalar_prefetch = 0 : i64, scratch_operands = 0 : i64, tpu.core_type = #tpu.core_type<tc>, window_params = [{transform_indices = @transform_0, window_bounds = array<i64: 16, 16>}, {pipeline_mode = #tpu.pipeline_mode<synchronous>, transform_indices = @transform_1, window_bounds = array<i64: 64, 16>}, {pipeline_mode = #tpu.pipeline_mode<synchronous>, transform_indices = @transform_2, window_bounds = array<i64: 64, 1>}, {pipeline_mode = #tpu.pipeline_mode<synchronous>, transform_indices = @transform_3, window_bounds = array<i64: 2, 64, 64>}, {pipeline_mode = #tpu.pipeline_mode<synchronous>, transform_indices = @transform_4, window_bounds = array<i64: 2, 128, 64>}, {pipeline_mode = #tpu.pipeline_mode<synchronous>, transform_indices = @transform_5, window_bounds = array<i64: 2, 128, 1>}, {pipeline_mode = #tpu.pipeline_mode<synchronous>, transform_indices = @transform_6, window_bounds = array<i64: 2, 64, 128>}, {pipeline_mode = #tpu.pipeline_mode<synchronous>, transform_indices = @transform_7, window_bounds = array<i64: 2, 6, 64, 1>}, {pipeline_mode = #tpu.pipeline_mode<synchronous>, transform_indices = @transform_8, window_bounds = array<i64: 64, 1>}, {pipeline_mode = #tpu.pipeline_mode<synchronous>, transform_indices = @transform_9, window_bounds = array<i64: 1, 1>}, {transform_indices = @transform_10, window_bounds = array<i64: 1, 16>}]} {
    %c0 = arith.constant 0 : index
    %c0_0 = arith.constant 0 : index
    %0 = vector.load %arg2[%c0, %c0_0] : memref<64x16xbf16, #tpu.memory_space<vmem>>, vector<64x16xbf16>
    %c0_1 = arith.constant 0 : index
    %c0_2 = arith.constant 0 : index
    %1 = vector.load %arg1[%c0_1, %c0_2] : memref<16x16xbf16, #tpu.memory_space<vmem>>, vector<16x16xbf16>
    %cst = arith.constant dense<0.000000e+00> : vector<64x16xf32>
    %2 = tpu.matmul %0, %1, %cst {dimension_numbers = #tpu.dot_dimension_numbers<[1], [0], [0], [1], [0, 0, 1, 1], [], []>} : vector<64x16xbf16>, vector<16x16xbf16>, vector<64x16xf32> -> vector<64x16xf32>
    %c0_3 = arith.constant 0 : index
    %c0_4 = arith.constant 0 : index
    %3 = vector.load %arg3[%c0_3, %c0_4] : memref<64x1xf32, #tpu.memory_space<vmem>>, vector<64x1xf32>
    %4 = vector.broadcast %3 : vector<64x1xf32> to vector<64x16xf32>
    %5 = arith.addf %2, %4 : vector<64x16xf32>
    %c0_5 = arith.constant 0 : index
    %c0_6 = arith.constant 0 : index
    %c0_7 = arith.constant 0 : index
    %c0_8 = arith.constant 0 : index
    %6 = vector.load %arg8[%c0_5, %c0_6, %c0_7, %c0_8] : memref<2x6x64x1xf32, #tpu.memory_space<vmem>>, vector<1x1x64x1xf32>
    %7 = vector.shape_cast %6 : vector<1x1x64x1xf32> to vector<64x1xf32>
    %c0_9 = arith.constant 0 : index
    %c1 = arith.constant 1 : index
    %c0_10 = arith.constant 0 : index
    %c0_11 = arith.constant 0 : index
    %8 = vector.load %arg8[%c0_9, %c1, %c0_10, %c0_11] : memref<2x6x64x1xf32, #tpu.memory_space<vmem>>, vector<1x1x64x1xf32>
    %9 = vector.shape_cast %8 : vector<1x1x64x1xf32> to vector<64x1xf32>
    %c0_12 = arith.constant 0 : index
    %c2 = arith.constant 2 : index
    %c0_13 = arith.constant 0 : index
    %c0_14 = arith.constant 0 : index
    %10 = vector.load %arg8[%c0_12, %c2, %c0_13, %c0_14] : memref<2x6x64x1xf32, #tpu.memory_space<vmem>>, vector<1x1x64x1xf32>
    %11 = vector.shape_cast %10 : vector<1x1x64x1xf32> to vector<64x1xf32>
    %c0_15 = arith.constant 0 : index
    %c3 = arith.constant 3 : index
    %c0_16 = arith.constant 0 : index
    %c0_17 = arith.constant 0 : index
    %12 = vector.load %arg8[%c0_15, %c3, %c0_16, %c0_17] : memref<2x6x64x1xf32, #tpu.memory_space<vmem>>, vector<1x1x64x1xf32>
    %13 = vector.shape_cast %12 : vector<1x1x64x1xf32> to vector<64x1xf32>
    %c0_18 = arith.constant 0 : index
    %c0_19 = arith.constant 0 : index
    %c0_20 = arith.constant 0 : index
    %14 = vector.load %arg4[%c0_18, %c0_19, %c0_20] : memref<2x64x64xbf16, #tpu.memory_space<vmem>>, vector<1x64x64xbf16>
    %15 = vector.shape_cast %14 : vector<1x64x64xbf16> to vector<64x64xbf16>
    %16 = arith.truncf %5 : vector<64x16xf32> to vector<64x16xbf16>
    %cst_21 = arith.constant dense<0.000000e+00> : vector<64x16xf32>
    %17 = tpu.matmul %15, %16, %cst_21 {dimension_numbers = #tpu.dot_dimension_numbers<[1], [0], [0], [1], [0, 0, 1, 1], [], []>} : vector<64x64xbf16>, vector<64x16xbf16>, vector<64x16xf32> -> vector<64x16xf32>
    %18 = vector.broadcast %7 : vector<64x1xf32> to vector<64x16xf32>
    %19 = arith.addf %17, %18 : vector<64x16xf32>
    %20 = arith.addf %5, %19 : vector<64x16xf32>
    %cst_22 = arith.constant dense<0.000000e+00> : vector<16xf32>
    %21 = vector.multi_reduction <add>, %20, %cst_22 [0] : vector<64x16xf32> to vector<16xf32>
    %22 = vector.shape_cast %21 : vector<16xf32> to vector<1x16xf32>
    %cst_23 = arith.constant 6.400000e+01 : f32
    %23 = vector.broadcast %cst_23 : f32 to vector<1x16xf32>
    %24 = arith.divf %22, %23 : vector<1x16xf32>
    %25 = vector.broadcast %24 : vector<1x16xf32> to vector<64x16xf32>
    %26 = arith.subf %20, %25 : vector<64x16xf32>
    %27 = arith.mulf %26, %26 : vector<64x16xf32>
    %cst_24 = arith.constant dense<0.000000e+00> : vector<16xf32>
    %28 = vector.multi_reduction <add>, %27, %cst_24 [0] : vector<64x16xf32> to vector<16xf32>
    %29 = vector.shape_cast %28 : vector<16xf32> to vector<1x16xf32>
    %cst_25 = arith.constant 6.400000e+01 : f32
    %30 = vector.broadcast %cst_25 : f32 to vector<1x16xf32>
    %31 = arith.divf %29, %30 : vector<1x16xf32>
    %32 = vector.broadcast %24 : vector<1x16xf32> to vector<64x16xf32>
    %33 = arith.subf %20, %32 : vector<64x16xf32>
    %cst_26 = arith.constant 9.99999974E-6 : f32
    %34 = vector.broadcast %cst_26 : f32 to vector<1x16xf32>
    %35 = arith.addf %31, %34 : vector<1x16xf32>
    %36 = math.rsqrt %35 : vector<1x16xf32>
    %37 = vector.broadcast %36 : vector<1x16xf32> to vector<64x16xf32>
    %38 = arith.mulf %33, %37 : vector<64x16xf32>
    %39 = vector.broadcast %11 : vector<64x1xf32> to vector<64x16xf32>
    %40 = arith.mulf %38, %39 : vector<64x16xf32>
    %41 = vector.broadcast %13 : vector<64x1xf32> to vector<64x16xf32>
    %42 = arith.addf %40, %41 : vector<64x16xf32>
    %c0_27 = arith.constant 0 : index
    %c0_28 = arith.constant 0 : index
    %c0_29 = arith.constant 0 : index
    %43 = vector.load %arg5[%c0_27, %c0_28, %c0_29] : memref<2x128x64xbf16, #tpu.memory_space<vmem>>, vector<1x128x64xbf16>
    %44 = vector.shape_cast %43 : vector<1x128x64xbf16> to vector<128x64xbf16>
    %45 = arith.truncf %42 : vector<64x16xf32> to vector<64x16xbf16>
    %cst_30 = arith.constant dense<0.000000e+00> : vector<128x16xf32>
    %46 = tpu.matmul %44, %45, %cst_30 {dimension_numbers = #tpu.dot_dimension_numbers<[1], [0], [0], [1], [0, 0, 1, 1], [], []>} : vector<128x64xbf16>, vector<64x16xbf16>, vector<128x16xf32> -> vector<128x16xf32>
    %c0_31 = arith.constant 0 : index
    %c0_32 = arith.constant 0 : index
    %c0_33 = arith.constant 0 : index
    %47 = vector.load %arg6[%c0_31, %c0_32, %c0_33] : memref<2x128x1xf32, #tpu.memory_space<vmem>>, vector<1x128x1xf32>
    %48 = vector.shape_cast %47 : vector<1x128x1xf32> to vector<128x1xf32>
    %49 = vector.broadcast %48 : vector<128x1xf32> to vector<128x16xf32>
    %50 = arith.addf %46, %49 : vector<128x16xf32>
    %51 = arith.truncf %50 : vector<128x16xf32> to vector<128x16xbf16>
    %cst_34 = arith.constant 0.000000e+00 : bf16
    %52 = vector.broadcast %cst_34 : bf16 to vector<128x16xbf16>
    %53 = arith.maximumf %51, %52 : vector<128x16xbf16>
    %c0_35 = arith.constant 0 : index
    %c0_36 = arith.constant 0 : index
    %c0_37 = arith.constant 0 : index
    %54 = vector.load %arg7[%c0_35, %c0_36, %c0_37] : memref<2x64x128xbf16, #tpu.memory_space<vmem>>, vector<1x64x128xbf16>
    %55 = vector.shape_cast %54 : vector<1x64x128xbf16> to vector<64x128xbf16>
    %cst_38 = arith.constant dense<0.000000e+00> : vector<64x16xf32>
    %56 = tpu.matmul %55, %53, %cst_38 {dimension_numbers = #tpu.dot_dimension_numbers<[1], [0], [0], [1], [0, 0, 1, 1], [], []>} : vector<64x128xbf16>, vector<128x16xbf16>, vector<64x16xf32> -> vector<64x16xf32>
    %57 = arith.addf %42, %56 : vector<64x16xf32>
    %58 = vector.broadcast %9 : vector<64x1xf32> to vector<64x16xf32>
    %59 = arith.addf %57, %58 : vector<64x16xf32>
    %c0_39 = arith.constant 0 : index
    %c4 = arith.constant 4 : index
    %c0_40 = arith.constant 0 : index
    %c0_41 = arith.constant 0 : index
    %60 = vector.load %arg8[%c0_39, %c4, %c0_40, %c0_41] : memref<2x6x64x1xf32, #tpu.memory_space<vmem>>, vector<1x1x64x1xf32>
    %61 = vector.shape_cast %60 : vector<1x1x64x1xf32> to vector<64x1xf32>
    %c0_42 = arith.constant 0 : index
    %c5 = arith.constant 5 : index
    %c0_43 = arith.constant 0 : index
    %c0_44 = arith.constant 0 : index
    %62 = vector.load %arg8[%c0_42, %c5, %c0_43, %c0_44] : memref<2x6x64x1xf32, #tpu.memory_space<vmem>>, vector<1x1x64x1xf32>
    %63 = vector.shape_cast %62 : vector<1x1x64x1xf32> to vector<64x1xf32>
    %cst_45 = arith.constant dense<0.000000e+00> : vector<16xf32>
    %64 = vector.multi_reduction <add>, %59, %cst_45 [0] : vector<64x16xf32> to vector<16xf32>
    %65 = vector.shape_cast %64 : vector<16xf32> to vector<1x16xf32>
    %cst_46 = arith.constant 6.400000e+01 : f32
    %66 = vector.broadcast %cst_46 : f32 to vector<1x16xf32>
    %67 = arith.divf %65, %66 : vector<1x16xf32>
    %68 = vector.broadcast %67 : vector<1x16xf32> to vector<64x16xf32>
    %69 = arith.subf %59, %68 : vector<64x16xf32>
    %70 = arith.mulf %69, %69 : vector<64x16xf32>
    %cst_47 = arith.constant dense<0.000000e+00> : vector<16xf32>
    %71 = vector.multi_reduction <add>, %70, %cst_47 [0] : vector<64x16xf32> to vector<16xf32>
    %72 = vector.shape_cast %71 : vector<16xf32> to vector<1x16xf32>
    %cst_48 = arith.constant 6.400000e+01 : f32
    %73 = vector.broadcast %cst_48 : f32 to vector<1x16xf32>
    %74 = arith.divf %72, %73 : vector<1x16xf32>
    %75 = vector.broadcast %67 : vector<1x16xf32> to vector<64x16xf32>
    %76 = arith.subf %59, %75 : vector<64x16xf32>
    %cst_49 = arith.constant 9.99999974E-6 : f32
    %77 = vector.broadcast %cst_49 : f32 to vector<1x16xf32>
    %78 = arith.addf %74, %77 : vector<1x16xf32>
    %79 = math.rsqrt %78 : vector<1x16xf32>
    %80 = vector.broadcast %79 : vector<1x16xf32> to vector<64x16xf32>
    %81 = arith.mulf %76, %80 : vector<64x16xf32>
    %82 = vector.broadcast %61 : vector<64x1xf32> to vector<64x16xf32>
    %83 = arith.mulf %81, %82 : vector<64x16xf32>
    %84 = vector.broadcast %63 : vector<64x1xf32> to vector<64x16xf32>
    %85 = arith.addf %83, %84 : vector<64x16xf32>
    %c1_50 = arith.constant 1 : index
    %c0_51 = arith.constant 0 : index
    %c0_52 = arith.constant 0 : index
    %c0_53 = arith.constant 0 : index
    %86 = vector.load %arg8[%c1_50, %c0_51, %c0_52, %c0_53] : memref<2x6x64x1xf32, #tpu.memory_space<vmem>>, vector<1x1x64x1xf32>
    %87 = vector.shape_cast %86 : vector<1x1x64x1xf32> to vector<64x1xf32>
    %c1_54 = arith.constant 1 : index
    %c1_55 = arith.constant 1 : index
    %c0_56 = arith.constant 0 : index
    %c0_57 = arith.constant 0 : index
    %88 = vector.load %arg8[%c1_54, %c1_55, %c0_56, %c0_57] : memref<2x6x64x1xf32, #tpu.memory_space<vmem>>, vector<1x1x64x1xf32>
    %89 = vector.shape_cast %88 : vector<1x1x64x1xf32> to vector<64x1xf32>
    %c1_58 = arith.constant 1 : index
    %c2_59 = arith.constant 2 : index
    %c0_60 = arith.constant 0 : index
    %c0_61 = arith.constant 0 : index
    %90 = vector.load %arg8[%c1_58, %c2_59, %c0_60, %c0_61] : memref<2x6x64x1xf32, #tpu.memory_space<vmem>>, vector<1x1x64x1xf32>
    %91 = vector.shape_cast %90 : vector<1x1x64x1xf32> to vector<64x1xf32>
    %c1_62 = arith.constant 1 : index
    %c3_63 = arith.constant 3 : index
    %c0_64 = arith.constant 0 : index
    %c0_65 = arith.constant 0 : index
    %92 = vector.load %arg8[%c1_62, %c3_63, %c0_64, %c0_65] : memref<2x6x64x1xf32, #tpu.memory_space<vmem>>, vector<1x1x64x1xf32>
    %93 = vector.shape_cast %92 : vector<1x1x64x1xf32> to vector<64x1xf32>
    %c1_66 = arith.constant 1 : index
    %c0_67 = arith.constant 0 : index
    %c0_68 = arith.constant 0 : index
    %94 = vector.load %arg4[%c1_66, %c0_67, %c0_68] : memref<2x64x64xbf16, #tpu.memory_space<vmem>>, vector<1x64x64xbf16>
    %95 = vector.shape_cast %94 : vector<1x64x64xbf16> to vector<64x64xbf16>
    %96 = arith.truncf %85 : vector<64x16xf32> to vector<64x16xbf16>
    %cst_69 = arith.constant dense<0.000000e+00> : vector<64x16xf32>
    %97 = tpu.matmul %95, %96, %cst_69 {dimension_numbers = #tpu.dot_dimension_numbers<[1], [0], [0], [1], [0, 0, 1, 1], [], []>} : vector<64x64xbf16>, vector<64x16xbf16>, vector<64x16xf32> -> vector<64x16xf32>
    %98 = vector.broadcast %87 : vector<64x1xf32> to vector<64x16xf32>
    %99 = arith.addf %97, %98 : vector<64x16xf32>
    %100 = arith.addf %85, %99 : vector<64x16xf32>
    %cst_70 = arith.constant dense<0.000000e+00> : vector<16xf32>
    %101 = vector.multi_reduction <add>, %100, %cst_70 [0] : vector<64x16xf32> to vector<16xf32>
    %102 = vector.shape_cast %101 : vector<16xf32> to vector<1x16xf32>
    %cst_71 = arith.constant 6.400000e+01 : f32
    %103 = vector.broadcast %cst_71 : f32 to vector<1x16xf32>
    %104 = arith.divf %102, %103 : vector<1x16xf32>
    %105 = vector.broadcast %104 : vector<1x16xf32> to vector<64x16xf32>
    %106 = arith.subf %100, %105 : vector<64x16xf32>
    %107 = arith.mulf %106, %106 : vector<64x16xf32>
    %cst_72 = arith.constant dense<0.000000e+00> : vector<16xf32>
    %108 = vector.multi_reduction <add>, %107, %cst_72 [0] : vector<64x16xf32> to vector<16xf32>
    %109 = vector.shape_cast %108 : vector<16xf32> to vector<1x16xf32>
    %cst_73 = arith.constant 6.400000e+01 : f32
    %110 = vector.broadcast %cst_73 : f32 to vector<1x16xf32>
    %111 = arith.divf %109, %110 : vector<1x16xf32>
    %112 = vector.broadcast %104 : vector<1x16xf32> to vector<64x16xf32>
    %113 = arith.subf %100, %112 : vector<64x16xf32>
    %cst_74 = arith.constant 9.99999974E-6 : f32
    %114 = vector.broadcast %cst_74 : f32 to vector<1x16xf32>
    %115 = arith.addf %111, %114 : vector<1x16xf32>
    %116 = math.rsqrt %115 : vector<1x16xf32>
    %117 = vector.broadcast %116 : vector<1x16xf32> to vector<64x16xf32>
    %118 = arith.mulf %113, %117 : vector<64x16xf32>
    %119 = vector.broadcast %91 : vector<64x1xf32> to vector<64x16xf32>
    %120 = arith.mulf %118, %119 : vector<64x16xf32>
    %121 = vector.broadcast %93 : vector<64x1xf32> to vector<64x16xf32>
    %122 = arith.addf %120, %121 : vector<64x16xf32>
    %c1_75 = arith.constant 1 : index
    %c0_76 = arith.constant 0 : index
    %c0_77 = arith.constant 0 : index
    %123 = vector.load %arg5[%c1_75, %c0_76, %c0_77] : memref<2x128x64xbf16, #tpu.memory_space<vmem>>, vector<1x128x64xbf16>
    %124 = vector.shape_cast %123 : vector<1x128x64xbf16> to vector<128x64xbf16>
    %125 = arith.truncf %122 : vector<64x16xf32> to vector<64x16xbf16>
    %cst_78 = arith.constant dense<0.000000e+00> : vector<128x16xf32>
    %126 = tpu.matmul %124, %125, %cst_78 {dimension_numbers = #tpu.dot_dimension_numbers<[1], [0], [0], [1], [0, 0, 1, 1], [], []>} : vector<128x64xbf16>, vector<64x16xbf16>, vector<128x16xf32> -> vector<128x16xf32>
    %c1_79 = arith.constant 1 : index
    %c0_80 = arith.constant 0 : index
    %c0_81 = arith.constant 0 : index
    %127 = vector.load %arg6[%c1_79, %c0_80, %c0_81] : memref<2x128x1xf32, #tpu.memory_space<vmem>>, vector<1x128x1xf32>
    %128 = vector.shape_cast %127 : vector<1x128x1xf32> to vector<128x1xf32>
    %129 = vector.broadcast %128 : vector<128x1xf32> to vector<128x16xf32>
    %130 = arith.addf %126, %129 : vector<128x16xf32>
    %131 = arith.truncf %130 : vector<128x16xf32> to vector<128x16xbf16>
    %cst_82 = arith.constant 0.000000e+00 : bf16
    %132 = vector.broadcast %cst_82 : bf16 to vector<128x16xbf16>
    %133 = arith.maximumf %131, %132 : vector<128x16xbf16>
    %c1_83 = arith.constant 1 : index
    %c0_84 = arith.constant 0 : index
    %c0_85 = arith.constant 0 : index
    %134 = vector.load %arg7[%c1_83, %c0_84, %c0_85] : memref<2x64x128xbf16, #tpu.memory_space<vmem>>, vector<1x64x128xbf16>
    %135 = vector.shape_cast %134 : vector<1x64x128xbf16> to vector<64x128xbf16>
    %cst_86 = arith.constant dense<0.000000e+00> : vector<64x16xf32>
    %136 = tpu.matmul %135, %133, %cst_86 {dimension_numbers = #tpu.dot_dimension_numbers<[1], [0], [0], [1], [0, 0, 1, 1], [], []>} : vector<64x128xbf16>, vector<128x16xbf16>, vector<64x16xf32> -> vector<64x16xf32>
    %137 = arith.addf %122, %136 : vector<64x16xf32>
    %138 = vector.broadcast %89 : vector<64x1xf32> to vector<64x16xf32>
    %139 = arith.addf %137, %138 : vector<64x16xf32>
    %cst_87 = arith.constant dense<0.000000e+00> : vector<16xf32>
    %140 = vector.multi_reduction <add>, %139, %cst_87 [0] : vector<64x16xf32> to vector<16xf32>
    %141 = vector.shape_cast %140 : vector<16xf32> to vector<1x16xf32>
    %cst_88 = arith.constant 6.400000e+01 : f32
    %142 = vector.broadcast %cst_88 : f32 to vector<1x16xf32>
    %143 = arith.divf %141, %142 : vector<1x16xf32>
    %144 = vector.broadcast %143 : vector<1x16xf32> to vector<64x16xf32>
    %145 = arith.subf %139, %144 : vector<64x16xf32>
    %146 = arith.mulf %145, %145 : vector<64x16xf32>
    %cst_89 = arith.constant dense<0.000000e+00> : vector<16xf32>
    %147 = vector.multi_reduction <add>, %146, %cst_89 [0] : vector<64x16xf32> to vector<16xf32>
    %148 = vector.shape_cast %147 : vector<16xf32> to vector<1x16xf32>
    %cst_90 = arith.constant 6.400000e+01 : f32
    %149 = vector.broadcast %cst_90 : f32 to vector<1x16xf32>
    %150 = arith.divf %148, %149 : vector<1x16xf32>
    %c0_91 = arith.constant 0 : index
    %c0_92 = arith.constant 0 : index
    %151 = vector.load %arg9[%c0_91, %c0_92] : memref<64x1xf32, #tpu.memory_space<vmem>>, vector<64x1xf32>
    %152 = vector.broadcast %151 : vector<64x1xf32> to vector<64x16xf32>
    %153 = arith.mulf %139, %152 : vector<64x16xf32>
    %cst_93 = arith.constant dense<0.000000e+00> : vector<16xf32>
    %154 = vector.multi_reduction <add>, %153, %cst_93 [0] : vector<64x16xf32> to vector<16xf32>
    %155 = vector.shape_cast %154 : vector<16xf32> to vector<1x16xf32>
    %cst_94 = arith.constant 9.99999974E-6 : f32
    %156 = vector.broadcast %cst_94 : f32 to vector<1x16xf32>
    %157 = arith.addf %150, %156 : vector<1x16xf32>
    %158 = math.rsqrt %157 : vector<1x16xf32>
    %159 = arith.mulf %158, %155 : vector<1x16xf32>
    %c0_95 = arith.constant 0 : index
    %c0_96 = arith.constant 0 : index
    %160 = vector.load %arg10[%c0_95, %c0_96] : memref<1x1xf32, #tpu.memory_space<vmem>>, vector<1x1xf32>
    %161 = vector.broadcast %160 : vector<1x1xf32> to vector<1x16xf32>
    %162 = arith.addf %159, %161 : vector<1x16xf32>
    %c0_97 = arith.constant 0 : index
    %c0_98 = arith.constant 0 : index
    %163 = vector.load %arg11[%c0_97, %c0_98] : memref<1x16xf32, #tpu.memory_space<vmem>>, vector<1x16xf32>
    tpu.vector_store %arg11[%c0_97, %c0_98], %162 {strides = array<i32>} : memref<1x16xf32, #tpu.memory_space<vmem>>, vector<1x16xf32>,
    return
  }
  func.func @transform_0(%arg0: i32) -> (i32, i32) {
    %c0_i32 = arith.constant 0 : i32
    %c0_i32_0 = arith.constant 0 : i32
    return %c0_i32, %arg0 : i32, i32
  }
  func.func @transform_1(%arg0: i32) -> (i32, i32) {
    %c0_i32 = arith.constant 0 : i32
    %c0_i32_0 = arith.constant 0 : i32
    %c0_i32_1 = arith.constant 0 : i32
    return %c0_i32, %c0_i32_0 : i32, i32
  }
  func.func @transform_2(%arg0: i32) -> (i32, i32) {
    %c0_i32 = arith.constant 0 : i32
    %c0_i32_0 = arith.constant 0 : i32
    %c0_i32_1 = arith.constant 0 : i32
    return %c0_i32, %c0_i32_0 : i32, i32
  }
  func.func @transform_3(%arg0: i32) -> (i32, i32, i32) {
    %c0_i32 = arith.constant 0 : i32
    %c0_i32_0 = arith.constant 0 : i32
    %c0_i32_1 = arith.constant 0 : i32
    %c0_i32_2 = arith.constant 0 : i32
    return %c0_i32, %c0_i32_0, %c0_i32_1 : i32, i32, i32
  }
  func.func @transform_4(%arg0: i32) -> (i32, i32, i32) {
    %c0_i32 = arith.constant 0 : i32
    %c0_i32_0 = arith.constant 0 : i32
    %c0_i32_1 = arith.constant 0 : i32
    %c0_i32_2 = arith.constant 0 : i32
    return %c0_i32, %c0_i32_0, %c0_i32_1 : i32, i32, i32
  }
  func.func @transform_5(%arg0: i32) -> (i32, i32, i32) {
    %c0_i32 = arith.constant 0 : i32
    %c0_i32_0 = arith.constant 0 : i32
    %c0_i32_1 = arith.constant 0 : i32
    %c0_i32_2 = arith.constant 0 : i32
    return %c0_i32, %c0_i32_0, %c0_i32_1 : i32, i32, i32
  }
  func.func @transform_6(%arg0: i32) -> (i32, i32, i32) {
    %c0_i32 = arith.constant 0 : i32
    %c0_i32_0 = arith.constant 0 : i32
    %c0_i32_1 = arith.constant 0 : i32
    %c0_i32_2 = arith.constant 0 : i32
    return %c0_i32, %c0_i32_0, %c0_i32_1 : i32, i32, i32
  }
  func.func @transform_7(%arg0: i32) -> (i32, i32, i32, i32) {
    %c0_i32 = arith.constant 0 : i32
    %c0_i32_0 = arith.constant 0 : i32
    %c0_i32_1 = arith.constant 0 : i32
    %c0_i32_2 = arith.constant 0 : i32
    %c0_i32_3 = arith.constant 0 : i32
    return %c0_i32, %c0_i32_0, %c0_i32_1, %c0_i32_2 : i32, i32, i32, i32
  }
  func.func @transform_8(%arg0: i32) -> (i32, i32) {
    %c0_i32 = arith.constant 0 : i32
    %c0_i32_0 = arith.constant 0 : i32
    %c0_i32_1 = arith.constant 0 : i32
    return %c0_i32, %c0_i32_0 : i32, i32
  }
  func.func @transform_9(%arg0: i32) -> (i32, i32) {
    %c0_i32 = arith.constant 0 : i32
    %c0_i32_0 = arith.constant 0 : i32
    %c0_i32_1 = arith.constant 0 : i32
    return %c0_i32, %c0_i32_0 : i32, i32
  }
  func.func @transform_10(%arg0: i32) -> (i32, i32) {
    %c0_i32 = arith.constant 0 : i32
    %c0_i32_0 = arith.constant 0 : i32
    return %c0_i32, %arg0 : i32, i32
  }
}

</mosaic_0001>

<llo_original>
// kernel: tpu_custom_call.1
$region0: #{tpu_custom_call.1}
  #allocation0 [shape = 'u32[]', space=smem, size = 0x4, offset = 0x4, fixed_abs, tag = 'smem constant byte address 0x4 - core index']
  #allocation1 [shape = 'u32[144,128]{1,0:T(1,128)}', space=vmem, size = 0x12000, scoped, tag = 'internal scratch']
  #allocation2 [shape = 'f32[1,1]{1,0:T(1,128)S(1)}', space=vmem, size = 0x200, scoped, tag = 'scoped memory for tpu_custom_call.1']
  %s0 = inlined_call_operand.vmem [shape: bf16[16,16], index: 0, kind: input, shape index: {}]
  %s1 = inlined_call_operand.vmem [shape: bf16[64,16], index: 1, kind: input, shape index: {}]
  %s2 = inlined_call_operand.vmem [shape: f32[64,1], index: 2, kind: input, shape index: {}]
  %s3 = inlined_call_operand.vmem [shape: bf16[2,64,64], index: 3, kind: input, shape index: {}]
  %s4 = inlined_call_operand.vmem [shape: bf16[2,128,64], index: 4, kind: input, shape index: {}]
  %s5 = inlined_call_operand.vmem [shape: f32[2,128,1], index: 5, kind: input, shape index: {}]
  %s6 = inlined_call_operand.vmem [shape: bf16[2,64,128], index: 6, kind: input, shape index: {}]
  %s7 = inlined_call_operand.vmem [shape: f32[2,6,64,1], index: 7, kind: input, shape index: {}]
  %s8 = inlined_call_operand.vmem [shape: f32[64,1], index: 8, kind: input, shape index: {}]
  %s9 = inlined_call_operand.<no memory space> [shape: f32[1,1], index: 9, kind: input, shape index: {}]
  %s10 = inlined_call_operand.hbm [shape: f32[1,16], index: 10, kind: output, shape index: {}]
  %s11 = sld [smem:[#allocation0]]
  $region50: #{tpu_custom_call.1} parent=0
    _
  %s13 = ssub.s32 1, %s11
  %s14 = scalar_select 0, %s13, %s11
  %v15 = vstv %s9
  %16 = vst [vmem:[#allocation2] sm:$0x1] %v15
  $region1: #{tpu_custom_call.1} parent=0
    #allocation3 [shape = 'u8[512]{0}', space=vmem, size = 0x400, scoped, tag = 'output window, operand 0, single buffered']
    #allocation4 [shape = 's32[1]{0}', space=sflag, size = 0x4, scoped, tag = 'scoped memory for tpu_custom_call.1']
    %17 = vsyncpa [#allocation4], 0
    // Predicated region
    $region2: #{tpu_custom_call.1} parent=1 // pred_check
      _
    $region3: #{tpu_custom_call.1} parent=1 // pred_check_branch
      %19 = sbr.rel (0) target = $region5
    $region4: #{tpu_custom_call.1} parent=1 // pred_region
      _
    $region5: #{tpu_custom_call.1} parent=1 // pred_fallthru
      _
    // Predicated region
    $region6: #{tpu_custom_call.1} parent=1 // pred_check
      _
    $region7: #{tpu_custom_call.1} parent=1 // pred_check_branch
      %21 = sbr.rel (0) target = $region9
    $region8: #{tpu_custom_call.1} parent=1 // pred_region
      _
    $region9: #{tpu_custom_call.1} parent=1 // pred_fallthru
      _
    // Predicated region
    $region10: #{tpu_custom_call.1} parent=1 // pred_check
      _
    $region11: #{tpu_custom_call.1} parent=1 // pred_check_branch
      %23 = sbr.rel (0) target = $region13
    $region12: #{tpu_custom_call.1} parent=1 // pred_region
      _
    $region13: #{tpu_custom_call.1} parent=1 // pred_fallthru
      _
    // Predicated region
    $region14: #{tpu_custom_call.1} parent=1 // pred_check
      _
    $region15: #{tpu_custom_call.1} parent=1 // pred_check_branch
      %25 = sbr.rel (0) target = $region17
    $region16: #{tpu_custom_call.1} parent=1 // pred_region
      _
    $region17: #{tpu_custom_call.1} parent=1 // pred_fallthru
      _
    // Predicated region
    $region18: #{tpu_custom_call.1} parent=1 // pred_check
      _
    $region19: #{tpu_custom_call.1} parent=1 // pred_check_branch
      %27 = sbr.rel (0) target = $region21
    $region20: #{tpu_custom_call.1} parent=1 // pred_region
      _
    $region21: #{tpu_custom_call.1} parent=1 // pred_fallthru
      _
    // Predicated region
    $region22: #{tpu_custom_call.1} parent=1 // pred_check
      _
    $region23: #{tpu_custom_call.1} parent=1 // pred_check_branch
      %29 = sbr.rel (0) target = $region25
    $region24: #{tpu_custom_call.1} parent=1 // pred_region
      _
    $region25: #{tpu_custom_call.1} parent=1 // pred_fallthru
      _
    // Predicated region
    $region26: #{tpu_custom_call.1} parent=1 // pred_check
      _
    $region27: #{tpu_custom_call.1} parent=1 // pred_check_branch
      %31 = sbr.rel (0) target = $region29
    $region28: #{tpu_custom_call.1} parent=1 // pred_region
      _
    $region29: #{tpu_custom_call.1} parent=1 // pred_fallthru
      _
    // Predicated region
    $region30: #{tpu_custom_call.1} parent=1 // pred_check
      _
    $region31: #{tpu_custom_call.1} parent=1 // pred_check_branch
      %33 = sbr.rel (0) target = $region33
    $region32: #{tpu_custom_call.1} parent=1 // pred_region
      _
    $region33: #{tpu_custom_call.1} parent=1 // pred_fallthru
      _
    // Predicated region
    $region34: #{tpu_custom_call.1} parent=1 // pred_check
      _
    $region35: #{tpu_custom_call.1} parent=1 // pred_check_branch
      %35 = sbr.rel (0) target = $region37
    $region36: #{tpu_custom_call.1} parent=1 // pred_region
      _
    $region37: #{tpu_custom_call.1} parent=1 // pred_fallthru
      _
    // Predicated region
    $region38: #{tpu_custom_call.1} parent=1 // pred_check
      _
    $region39: #{tpu_custom_call.1} parent=1 // pred_check_branch
      %37 = sbr.rel (0) target = $region41
    $region40: #{tpu_custom_call.1} parent=1 // pred_region
      _
    $region41: #{tpu_custom_call.1} parent=1 // pred_fallthru
      _
    %v39 = vld [vmem:[%s1] sm:$0xf]
    %v40 = vld [vmem:[%s1 + $0x4] sm:$0xf]
    %v41 = vld [vmem:[%s1 + $0x8] sm:$0xf]
    %v42 = vld [vmem:[%s1 + $0xc] sm:$0xf]
    %v43 = vld [vmem:[%s1 + $0x10] sm:$0xf]
    %v44 = vld [vmem:[%s1 + $0x14] sm:$0xf]
    %v45 = vld [vmem:[%s1 + $0x18] sm:$0xf]
    %v46 = vld [vmem:[%s1 + $0x1c] sm:$0xf]
    %v47 = vld [vmem:[%s0] sm:$0xf]
    %v48 = vld [vmem:[%s0 + $0x4] sm:$0xf]
    %v49 = vld [vmem:[%s2] sm:$0xff]
    %v50 = vld [vmem:[%s2 + $0x8] sm:$0xff]
    %v51 = vld [vmem:[%s2 + $0x10] sm:$0xff]
    %v52 = vld [vmem:[%s2 + $0x18] sm:$0xff]
    %v53 = vld [vmem:[%s2 + $0x20] sm:$0xff]
    %v54 = vld [vmem:[%s2 + $0x28] sm:$0xff]
    %v55 = vld [vmem:[%s2 + $0x30] sm:$0xff]
    %v56 = vld [vmem:[%s2 + $0x38] sm:$0xff]
    %58 = vset.pattern.permute.xlu0 0
    %59 = vperm.xlu0 %58, %v49
    %v60 = vpop.permute.xlu0 %59
    %63 = vset.pattern.permute.xlu0 0
    %64 = vperm.xlu0 %63, %v50
    %v65 = vpop.permute.xlu0 %64
    %68 = vset.pattern.permute.xlu0 0
    %69 = vperm.xlu0 %68, %v51
    %v70 = vpop.permute.xlu0 %69
    %73 = vset.pattern.permute.xlu0 0
    %74 = vperm.xlu0 %73, %v52
    %v75 = vpop.permute.xlu0 %74
    %78 = vset.pattern.permute.xlu0 0
    %79 = vperm.xlu0 %78, %v53
    %v80 = vpop.permute.xlu0 %79
    %83 = vset.pattern.permute.xlu0 0
    %84 = vperm.xlu0 %83, %v54
    %v85 = vpop.permute.xlu0 %84
    %88 = vset.pattern.permute.xlu0 0
    %89 = vperm.xlu0 %88, %v55
    %v90 = vpop.permute.xlu0 %89
    %93 = vset.pattern.permute.xlu0 0
    %94 = vperm.xlu0 %93, %v56
    %v95 = vpop.permute.xlu0 %94
    %v105 = vunpack.c.l.b16 %v39
    %v106 = vunpack.c.l.b16 %v40
    %v107 = vunpack.c.l.b16 %v41
    %v108 = vunpack.c.l.b16 %v42
    %v109 = vunpack.c.l.b16 %v43
    %v110 = vunpack.c.l.b16 %v44
    %v111 = vunpack.c.l.b16 %v45
    %v112 = vunpack.c.l.b16 %v46
    %v113 = vpack.c.b16 %v106, %v105
    %v114 = vpack.c.b16 %v108, %v107
    %v115 = vpack.c.b16 %v110, %v109
    %v116 = vpack.c.b16 %v112, %v111
    %v119 = vunpack.c.l.b16 %v47
    %v120 = vunpack.c.l.b16 %v48
    %v121 = vpack.c.b16 %v120, %v119
    %vm123 = vcmask 130048
    %v125 = vsel %vm123, %v113, 0
    %v128 = vsel %vm123, %v114, 0
    %v131 = vsel %vm123, %v115, 0
    %v134 = vsel %vm123, %v116, 0
    %136 = vmatprep.subr.bf16.mxu0 0
    %137 = vmatpush1.bf16.msra.mxu0 %v121
    %138 = vmatprep.subr.bf16.mxu0 0
    %139 = vmatpush1.bf16.msra.mxu0 0
    %140 = vmatprep.subr.bf16.mxu0 0
    %141 = vmatpush1.bf16.msra.mxu0 0
    %142 = vmatprep.subr.bf16.mxu0 0
    %143 = vmatpush1.bf16.msra.mxu0 0
    %144 = vmatprep.subr.bf16.mxu0 0
    %145 = vmatpush1.bf16.msra.mxu0 0
    %146 = vmatprep.subr.bf16.mxu0 0
    %147 = vmatpush1.bf16.msra.mxu0 0
    %148 = vmatprep.subr.bf16.mxu0 0
    %149 = vmatpush1.bf16.msra.mxu0 0
    %150 = vmatprep.subr.bf16.mxu0 0
    %151 = vmatpush1.bf16.msra.mxu0 0
    %152 = vmatprep.subr.bf16.mxu0 0
    %153 = vmatpush1.bf16.msra.mxu0 0
    %154 = vmatprep.subr.bf16.mxu0 0
    %155 = vmatpush1.bf16.msra.mxu0 0
    %156 = vmatprep.subr.bf16.mxu0 0
    %157 = vmatpush1.bf16.msra.mxu0 0
    %158 = vmatprep.subr.bf16.mxu0 0
    %159 = vmatpush1.bf16.msra.mxu0 0
    %160 = vmatprep.subr.bf16.mxu0 0
    %161 = vmatpush1.bf16.msra.mxu0 0
    %162 = vmatprep.subr.bf16.mxu0 0
    %163 = vmatpush1.bf16.msra.mxu0 0
    %164 = vmatprep.subr.bf16.mxu0 0
    %165 = vmatpush1.bf16.msra.mxu0 0
    %166 = vmatprep.subr.bf16.mxu0 0
    %167 = vmatpush1.bf16.msra.mxu0 0
    %168 = vmatprep.mubr.bf16.mxu0 0
    %169 = vmatmul.mubr.bf16.gmra.mrb[0].mxu0 %v125
    %v170 = vpop.f32.mrb[0].mxu0
    %v171 = vadd.f32 %v60, %v170
    %v172 = vpop.f32.mrb[0].mxu0
    %v173 = vpop.f32.mrb[0].mxu0
    %v174 = vadd.f32 %v65, %v173
    %v175 = vpop.f32.mrb[0].mxu0
    %176 = vmatprep.mubr.bf16.mxu0 0
    %177 = vmatmul.mubr.bf16.gmra.mrb[0].mxu0 %v128
    %v178 = vpop.f32.mrb[0].mxu0
    %v179 = vadd.f32 %v70, %v178
    %v180 = vpop.f32.mrb[0].mxu0
    %v181 = vpop.f32.mrb[0].mxu0
    %v182 = vadd.f32 %v75, %v181
    %v183 = vpop.f32.mrb[0].mxu0
    %184 = vmatprep.mubr.bf16.mxu0 0
    %185 = vmatmul.mubr.bf16.gmra.mrb[0].mxu0 %v131
    %v186 = vpop.f32.mrb[0].mxu0
    %v187 = vadd.f32 %v80, %v186
    %v188 = vpop.f32.mrb[0].mxu0
    %v189 = vpop.f32.mrb[0].mxu0
    %v190 = vadd.f32 %v85, %v189
    %v191 = vpop.f32.mrb[0].mxu0
    %192 = vmatprep.mubr.bf16.mxu0 0
    %193 = vmatmul.mubr.bf16.gmra.mrb[0].mxu0 %v134
    %v194 = vpop.f32.mrb[0].mxu0
    %v195 = vadd.f32 %v90, %v194
    %v196 = vpop.f32.mrb[0].mxu0
    %v197 = vpop.f32.mrb[0].mxu0
    %v198 = vadd.f32 %v95, %v197
    %v199 = vpop.f32.mrb[0].mxu0
    %200 = vdwg.mxu0
    %v201 = vld [vmem:[%s7] sm:$0xff]
    %v202 = vld [vmem:[%s7 + $0x8] sm:$0xff]
    %v203 = vld [vmem:[%s7 + $0x10] sm:$0xff]
    %v204 = vld [vmem:[%s7 + $0x18] sm:$0xff]
    %v205 = vld [vmem:[%s7 + $0x20] sm:$0xff]
    %v206 = vld [vmem:[%s7 + $0x28] sm:$0xff]
    %v207 = vld [vmem:[%s7 + $0x30] sm:$0xff]
    %v208 = vld [vmem:[%s7 + $0x38] sm:$0xff]
    %s209 = scalar_lea.vmem %s7, 64
    %v210 = vld [vmem:[%s209] sm:$0xff]
    %v211 = vld [vmem:[%s209 + $0x8] sm:$0xff]
    %v212 = vld [vmem:[%s209 + $0x10] sm:$0xff]
    %v213 = vld [vmem:[%s209 + $0x18] sm:$0xff]
    %v214 = vld [vmem:[%s209 + $0x20] sm:$0xff]
    %v215 = vld [vmem:[%s209 + $0x28] sm:$0xff]
    %v216 = vld [vmem:[%s209 + $0x30] sm:$0xff]
    %v217 = vld [vmem:[%s209 + $0x38] sm:$0xff]
    %s218 = scalar_lea.vmem %s7, 128
    %v219 = vld [vmem:[%s218] sm:$0xff]
    %v220 = vld [vmem:[%s218 + $0x8] sm:$0xff]
    %v221 = vld [vmem:[%s218 + $0x10] sm:$0xff]
    %v222 = vld [vmem:[%s218 + $0x18] sm:$0xff]
    %v223 = vld [vmem:[%s218 + $0x20] sm:$0xff]
    %v224 = vld [vmem:[%s218 + $0x28] sm:$0xff]
    %v225 = vld [vmem:[%s218 + $0x30] sm:$0xff]
    %v226 = vld [vmem:[%s218 + $0x38] sm:$0xff]
    %s227 = scalar_lea.vmem %s7, 192
    %v228 = vld [vmem:[%s227] sm:$0xff]
    %v229 = vld [vmem:[%s227 + $0x8] sm:$0xff]
    %v230 = vld [vmem:[%s227 + $0x10] sm:$0xff]
    %v231 = vld [vmem:[%s227 + $0x18] sm:$0xff]
    %v232 = vld [vmem:[%s227 + $0x20] sm:$0xff]
    %v233 = vld [vmem:[%s227 + $0x28] sm:$0xff]
    %v234 = vld [vmem:[%s227 + $0x30] sm:$0xff]
    %v235 = vld [vmem:[%s227 + $0x38] sm:$0xff]
    %v236 = vld [vmem:[%s3] sm:$0xf]
    %v237 = vld [vmem:[%s3 + $0x4] sm:$0xf]
    %v238 = vld [vmem:[%s3 + $0x8] sm:$0xf]
    %v239 = vld [vmem:[%s3 + $0xc] sm:$0xf]
    %v240 = vld [vmem:[%s3 + $0x10] sm:$0xf]
    %v241 = vld [vmem:[%s3 + $0x14] sm:$0xf]
    %v242 = vld [vmem:[%s3 + $0x18] sm:$0xf]
    %v243 = vld [vmem:[%s3 + $0x1c] sm:$0xf]
    %v244 = vpack.c.bf16 %v174, %v171
    %v245 = vpack.c.bf16 %v182, %v179
    %v246 = vpack.c.bf16 %v190, %v187
    %v247 = vpack.c.bf16 %v198, %v195
    %249 = vset.pattern.permute.xlu0 0
    %250 = vperm.xlu0 %249, %v201
    %v251 = vpop.permute.xlu0 %250
    %254 = vset.pattern.permute.xlu0 0
    %255 = vperm.xlu0 %254, %v202
    %v256 = vpop.permute.xlu0 %255
    %259 = vset.pattern.permute.xlu0 0
    %260 = vperm.xlu0 %259, %v203
    %v261 = vpop.permute.xlu0 %260
    %264 = vset.pattern.permute.xlu0 0
    %265 = vperm.xlu0 %264, %v204
    %v266 = vpop.permute.xlu0 %265
    %269 = vset.pattern.permute.xlu0 0
    %270 = vperm.xlu0 %269, %v205
    %v271 = vpop.permute.xlu0 %270
    %274 = vset.pattern.permute.xlu0 0
    %275 = vperm.xlu0 %274, %v206
    %v276 = vpop.permute.xlu0 %275
    %279 = vset.pattern.permute.xlu0 0
    %280 = vperm.xlu0 %279, %v207
    %v281 = vpop.permute.xlu0 %280
    %284 = vset.pattern.permute.xlu0 0
    %285 = vperm.xlu0 %284, %v208
    %v286 = vpop.permute.xlu0 %285
    %v296 = vunpack.c.l.b16 %v236
    %v297 = vunpack.c.l.b16 %v237
    %v298 = vunpack.c.l.b16 %v238
    %v299 = vunpack.c.l.b16 %v239
    %v300 = vunpack.c.l.b16 %v240
    %v301 = vunpack.c.l.b16 %v241
    %v302 = vunpack.c.l.b16 %v242
    %v303 = vunpack.c.l.b16 %v243
    %v304 = vpack.c.b16 %v297, %v296
    %v305 = vpack.c.b16 %v299, %v298
    %v306 = vpack.c.b16 %v301, %v300
    %v307 = vpack.c.b16 %v303, %v302
    %vm308 = vcmask 523264
    %v310 = vsel %vm308, %v304, 0
    %v313 = vsel %vm308, %v305, 0
    %v316 = vsel %vm308, %v306, 0
    %v319 = vsel %vm308, %v307, 0
    %321 = vmatprep.subr.bf16.mxu0 0
    %322 = vmatpush1.bf16.msra.mxu0 %v244
    %323 = vmatprep.subr.bf16.mxu0 0
    %324 = vmatpush1.bf16.msra.mxu0 %v245
    %325 = vmatprep.subr.bf16.mxu0 0
    %326 = vmatpush1.bf16.msra.mxu0 %v246
    %327 = vmatprep.subr.bf16.mxu0 0
    %328 = vmatpush1.bf16.msra.mxu0 %v247
    %329 = vmatprep.subr.bf16.mxu0 0
    %330 = vmatpush1.bf16.msra.mxu0 0
    %331 = vmatprep.subr.bf16.mxu0 0
    %332 = vmatpush1.bf16.msra.mxu0 0
    %333 = vmatprep.subr.bf16.mxu0 0
    %334 = vmatpush1.bf16.msra.mxu0 0
    %335 = vmatprep.subr.bf16.mxu0 0
    %336 = vmatpush1.bf16.msra.mxu0 0
    %337 = vmatprep.subr.bf16.mxu0 0
    %338 = vmatpush1.bf16.msra.mxu0 0
    %339 = vmatprep.subr.bf16.mxu0 0
    %340 = vmatpush1.bf16.msra.mxu0 0
    %341 = vmatprep.subr.bf16.mxu0 0
    %342 = vmatpush1.bf16.msra.mxu0 0
    %343 = vmatprep.subr.bf16.mxu0 0
    %344 = vmatpush1.bf16.msra.mxu0 0
    %345 = vmatprep.subr.bf16.mxu0 0
    %346 = vmatpush1.bf16.msra.mxu0 0
    %347 = vmatprep.subr.bf16.mxu0 0
    %348 = vmatpush1.bf16.msra.mxu0 0
    %349 = vmatprep.subr.bf16.mxu0 0
    %350 = vmatpush1.bf16.msra.mxu0 0
    %351 = vmatprep.subr.bf16.mxu0 0
    %352 = vmatpush1.bf16.msra.mxu0 0
    %353 = vmatprep.mubr.bf16.mxu0 0
    %354 = vmatmul.mubr.bf16.gmra.mrb[0].mxu0 %v310
    %v355 = vpop.f32.mrb[0].mxu0
    %v356 = vadd.f32 %v251, %v355
    %v357 = vpop.f32.mrb[0].mxu0
    %v358 = vpop.f32.mrb[0].mxu0
    %v359 = vadd.f32 %v256, %v358
    %v360 = vpop.f32.mrb[0].mxu0
    %361 = vmatprep.mubr.bf16.mxu0 0
    %362 = vmatmul.mubr.bf16.gmra.mrb[0].mxu0 %v313
    %v363 = vpop.f32.mrb[0].mxu0
    %v364 = vadd.f32 %v261, %v363
    %v365 = vpop.f32.mrb[0].mxu0
    %v366 = vpop.f32.mrb[0].mxu0
    %v367 = vadd.f32 %v266, %v366
    %v368 = vpop.f32.mrb[0].mxu0
    %369 = vmatprep.mubr.bf16.mxu0 0
    %370 = vmatmul.mubr.bf16.gmra.mrb[0].mxu0 %v316
    %v371 = vpop.f32.mrb[0].mxu0
    %v372 = vadd.f32 %v271, %v371
    %v373 = vpop.f32.mrb[0].mxu0
    %v374 = vpop.f32.mrb[0].mxu0
    %v375 = vadd.f32 %v276, %v374
    %v376 = vpop.f32.mrb[0].mxu0
    %377 = vmatprep.mubr.bf16.mxu0 0
    %378 = vmatmul.mubr.bf16.gmra.mrb[0].mxu0 %v319
    %v379 = vpop.f32.mrb[0].mxu0
    %v380 = vadd.f32 %v281, %v379
    %v381 = vpop.f32.mrb[0].mxu0
    %v382 = vpop.f32.mrb[0].mxu0
    %v383 = vadd.f32 %v286, %v382
    %v384 = vpop.f32.mrb[0].mxu0
    %385 = vdwg.mxu0
    %v386 = vadd.f32 %v171, %v356
    %v387 = vadd.f32 %v174, %v359
    %v388 = vadd.f32 %v179, %v364
    %v389 = vadd.f32 %v182, %v367
    %v390 = vadd.f32 %v187, %v372
    %v391 = vadd.f32 %v190, %v375
    %v392 = vadd.f32 %v195, %v380
    %v393 = vadd.f32 %v198, %v383
    %v394 = vsel %vm123, %v386, 0.0
    %v395 = vsel %vm123, %v387, 0.0
    %v396 = vadd.f32 %v394, %v395
    %v397 = vsel %vm123, %v388, 0.0
    %v398 = vadd.f32 %v396, %v397
    %v399 = vsel %vm123, %v389, 0.0
    %v400 = vadd.f32 %v398, %v399
    %v401 = vsel %vm123, %v390, 0.0
    %v402 = vadd.f32 %v400, %v401
    %v403 = vsel %vm123, %v391, 0.0
    %v404 = vadd.f32 %v402, %v403
    %v405 = vsel %vm123, %v392, 0.0
    %v406 = vadd.f32 %v404, %v405
    %v407 = vsel %vm123, %v393, 0.0
    %v408 = vadd.f32 %v406, %v407
    %v409 = vrot.slane %v408, 4
    %v410 = vadd.f32 %v408, %v409
    %v411 = vrot.slane %v410, 2
    %v412 = vadd.f32 %v410, %v411
    %v413 = vrot.slane %v412, 1
    %v414 = vadd.f32 %v412, %v413
    %v415 = vrcp.pop 64.0
    %v416 = vmul.f32 %v414, %v415
    %v417 = vsub.f32 %v386, %v416
    %v418 = vsub.f32 %v387, %v416
    %v419 = vsub.f32 %v388, %v416
    %v420 = vsub.f32 %v389, %v416
    %v421 = vsub.f32 %v390, %v416
    %v422 = vsub.f32 %v391, %v416
    %v423 = vsub.f32 %v392, %v416
    %v424 = vsub.f32 %v393, %v416
    %v425 = vmul.f32 %v417, %v417
    %v426 = vmul.f32 %v418, %v418
    %v427 = vmul.f32 %v419, %v419
    %v428 = vmul.f32 %v420, %v420
    %v429 = vmul.f32 %v421, %v421
    %v430 = vmul.f32 %v422, %v422
    %v431 = vmul.f32 %v423, %v423
    %v432 = vmul.f32 %v424, %v424
    %v433 = vsel %vm123, %v425, 0.0
    %v434 = vsel %vm123, %v426, 0.0
    %v435 = vadd.f32 %v433, %v434
    %v436 = vsel %vm123, %v427, 0.0
    %v437 = vadd.f32 %v435, %v436
    %v438 = vsel %vm123, %v428, 0.0
    %v439 = vadd.f32 %v437, %v438
    %v440 = vsel %vm123, %v429, 0.0
    %v441 = vadd.f32 %v439, %v440
    %v442 = vsel %vm123, %v430, 0.0
    %v443 = vadd.f32 %v441, %v442
    %v444 = vsel %vm123, %v431, 0.0
    %v445 = vadd.f32 %v443, %v444
    %v446 = vsel %vm123, %v432, 0.0
    %v447 = vadd.f32 %v445, %v446
    %v448 = vrot.slane %v447, 4
    %v449 = vadd.f32 %v447, %v448
    %v450 = vrot.slane %v449, 2
    %v451 = vadd.f32 %v449, %v450
    %v452 = vrot.slane %v451, 1
    %v453 = vadd.f32 %v451, %v452
    %v454 = vmul.f32 %v453, %v415
    %v455 = vadd.f32 %v454, 1e-05
    %v456 = vrsqrt.pop %v455
    %v457 = vmul.f32 %v417, %v456
    %v458 = vmul.f32 %v418, %v456
    %v459 = vmul.f32 %v419, %v456
    %v460 = vmul.f32 %v420, %v456
    %v461 = vmul.f32 %v421, %v456
    %v462 = vmul.f32 %v422, %v456
    %v463 = vmul.f32 %v423, %v456
    %v464 = vmul.f32 %v424, %v456
    %466 = vset.pattern.permute.xlu0 0
    %467 = vperm.xlu0 %466, %v219
    %v468 = vpop.permute.xlu0 %467
    %471 = vset.pattern.permute.xlu0 0
    %472 = vperm.xlu0 %471, %v220
    %v473 = vpop.permute.xlu0 %472
    %476 = vset.pattern.permute.xlu0 0
    %477 = vperm.xlu0 %476, %v221
    %v478 = vpop.permute.xlu0 %477
    %481 = vset.pattern.permute.xlu0 0
    %482 = vperm.xlu0 %481, %v222
    %v483 = vpop.permute.xlu0 %482
    %486 = vset.pattern.permute.xlu0 0
    %487 = vperm.xlu0 %486, %v223
    %v488 = vpop.permute.xlu0 %487
    %491 = vset.pattern.permute.xlu0 0
    %492 = vperm.xlu0 %491, %v224
    %v493 = vpop.permute.xlu0 %492
    %496 = vset.pattern.permute.xlu0 0
    %497 = vperm.xlu0 %496, %v225
    %v498 = vpop.permute.xlu0 %497
    %501 = vset.pattern.permute.xlu0 0
    %502 = vperm.xlu0 %501, %v226
    %v503 = vpop.permute.xlu0 %502
    %v505 = vmul.f32 %v457, %v468
    %v506 = vmul.f32 %v458, %v473
    %v507 = vmul.f32 %v459, %v478
    %v508 = vmul.f32 %v460, %v483
    %v509 = vmul.f32 %v461, %v488
    %v510 = vmul.f32 %v462, %v493
    %v511 = vmul.f32 %v463, %v498
    %v512 = vmul.f32 %v464, %v503
    %514 = vset.pattern.permute.xlu0 0
    %515 = vperm.xlu0 %514, %v228
    %v516 = vpop.permute.xlu0 %515
    %519 = vset.pattern.permute.xlu0 0
    %520 = vperm.xlu0 %519, %v229
    %v521 = vpop.permute.xlu0 %520
    %524 = vset.pattern.permute.xlu0 0
    %525 = vperm.xlu0 %524, %v230
    %v526 = vpop.permute.xlu0 %525
    %529 = vset.pattern.permute.xlu0 0
    %530 = vperm.xlu0 %529, %v231
    %v531 = vpop.permute.xlu0 %530
    %534 = vset.pattern.permute.xlu0 0
    %535 = vperm.xlu0 %534, %v232
    %v536 = vpop.permute.xlu0 %535
    %539 = vset.pattern.permute.xlu0 0
    %540 = vperm.xlu0 %539, %v233
    %v541 = vpop.permute.xlu0 %540
    %544 = vset.pattern.permute.xlu0 0
    %545 = vperm.xlu0 %544, %v234
    %v546 = vpop.permute.xlu0 %545
    %549 = vset.pattern.permute.xlu0 0
    %550 = vperm.xlu0 %549, %v235
    %v551 = vpop.permute.xlu0 %550
    %v553 = vadd.f32 %v505, %v516
    %v554 = vadd.f32 %v506, %v521
    %v555 = vadd.f32 %v507, %v526
    %v556 = vadd.f32 %v508, %v531
    %v557 = vadd.f32 %v509, %v536
    %v558 = vadd.f32 %v510, %v541
    %v559 = vadd.f32 %v511, %v546
    %v560 = vadd.f32 %v512, %v551
    %v561 = vld [vmem:[%s4] sm:$0xf]
    %v562 = vld [vmem:[%s4 + $0x4] sm:$0xf]
    %v563 = vld [vmem:[%s4 + $0x8] sm:$0xf]
    %v564 = vld [vmem:[%s4 + $0xc] sm:$0xf]
    %v565 = vld [vmem:[%s4 + $0x10] sm:$0xf]
    %v566 = vld [vmem:[%s4 + $0x14] sm:$0xf]
    %v567 = vld [vmem:[%s4 + $0x18] sm:$0xf]
    %v568 = vld [vmem:[%s4 + $0x1c] sm:$0xf]
    %v569 = vld [vmem:[%s4 + $0x20] sm:$0xf]
    %v570 = vld [vmem:[%s4 + $0x24] sm:$0xf]
    %v571 = vld [vmem:[%s4 + $0x28] sm:$0xf]
    %v572 = vld [vmem:[%s4 + $0x2c] sm:$0xf]
    %v573 = vld [vmem:[%s4 + $0x30] sm:$0xf]
    %v574 = vld [vmem:[%s4 + $0x34] sm:$0xf]
    %v575 = vld [vmem:[%s4 + $0x38] sm:$0xf]
    %v576 = vld [vmem:[%s4 + $0x3c] sm:$0xf]
    %v577 = vpack.c.bf16 %v554, %v553
    %v578 = vpack.c.bf16 %v556, %v555
    %v579 = vpack.c.bf16 %v558, %v557
    %v580 = vpack.c.bf16 %v560, %v559
    %v581 = vld [vmem:[%s5] sm:$0xff]
    %v582 = vld [vmem:[%s5 + $0x8] sm:$0xff]
    %v583 = vld [vmem:[%s5 + $0x10] sm:$0xff]
    %v584 = vld [vmem:[%s5 + $0x18] sm:$0xff]
    %v585 = vld [vmem:[%s5 + $0x20] sm:$0xff]
    %v586 = vld [vmem:[%s5 + $0x28] sm:$0xff]
    %v587 = vld [vmem:[%s5 + $0x30] sm:$0xff]
    %v588 = vld [vmem:[%s5 + $0x38] sm:$0xff]
    %v589 = vld [vmem:[%s5 + $0x40] sm:$0xff]
    %v590 = vld [vmem:[%s5 + $0x48] sm:$0xff]
    %v591 = vld [vmem:[%s5 + $0x50] sm:$0xff]
    %v592 = vld [vmem:[%s5 + $0x58] sm:$0xff]
    %v593 = vld [vmem:[%s5 + $0x60] sm:$0xff]
    %v594 = vld [vmem:[%s5 + $0x68] sm:$0xff]
    %v595 = vld [vmem:[%s5 + $0x70] sm:$0xff]
    %v596 = vld [vmem:[%s5 + $0x78] sm:$0xff]
    %598 = vset.pattern.permute.xlu0 0
    %599 = vperm.xlu0 %598, %v581
    %v600 = vpop.permute.xlu0 %599
    %603 = vset.pattern.permute.xlu0 0
    %604 = vperm.xlu0 %603, %v582
    %v605 = vpop.permute.xlu0 %604
    %608 = vset.pattern.permute.xlu0 0
    %609 = vperm.xlu0 %608, %v583
    %v610 = vpop.permute.xlu0 %609
    %613 = vset.pattern.permute.xlu0 0
    %614 = vperm.xlu0 %613, %v584
    %v615 = vpop.permute.xlu0 %614
    %618 = vset.pattern.permute.xlu0 0
    %619 = vperm.xlu0 %618, %v585
    %v620 = vpop.permute.xlu0 %619
    %623 = vset.pattern.permute.xlu0 0
    %624 = vperm.xlu0 %623, %v586
    %v625 = vpop.permute.xlu0 %624
    %628 = vset.pattern.permute.xlu0 0
    %629 = vperm.xlu0 %628, %v587
    %v630 = vpop.permute.xlu0 %629
    %633 = vset.pattern.permute.xlu0 0
    %634 = vperm.xlu0 %633, %v588
    %v635 = vpop.permute.xlu0 %634
    %638 = vset.pattern.permute.xlu0 0
    %639 = vperm.xlu0 %638, %v589
    %v640 = vpop.permute.xlu0 %639
    %643 = vset.pattern.permute.xlu0 0
    %644 = vperm.xlu0 %643, %v590
    %v645 = vpop.permute.xlu0 %644
    %648 = vset.pattern.permute.xlu0 0
    %649 = vperm.xlu0 %648, %v591
    %v650 = vpop.permute.xlu0 %649
    %653 = vset.pattern.permute.xlu0 0
    %654 = vperm.xlu0 %653, %v592
    %v655 = vpop.permute.xlu0 %654
    %658 = vset.pattern.permute.xlu0 0
    %659 = vperm.xlu0 %658, %v593
    %v660 = vpop.permute.xlu0 %659
    %663 = vset.pattern.permute.xlu0 0
    %664 = vperm.xlu0 %663, %v594
    %v665 = vpop.permute.xlu0 %664
    %668 = vset.pattern.permute.xlu0 0
    %669 = vperm.xlu0 %668, %v595
    %v670 = vpop.permute.xlu0 %669
    %673 = vset.pattern.permute.xlu0 0
    %674 = vperm.xlu0 %673, %v596
    %v675 = vpop.permute.xlu0 %674
    %v693 = vunpack.c.l.b16 %v561
    %v694 = vunpack.c.l.b16 %v562
    %v695 = vunpack.c.l.b16 %v563
    %v696 = vunpack.c.l.b16 %v564
    %v697 = vunpack.c.l.b16 %v565
    %v698 = vunpack.c.l.b16 %v566
    %v699 = vunpack.c.l.b16 %v567
    %v700 = vunpack.c.l.b16 %v568
    %v701 = vunpack.c.l.b16 %v569
    %v702 = vunpack.c.l.b16 %v570
    %v703 = vunpack.c.l.b16 %v571
    %v704 = vunpack.c.l.b16 %v572
    %v705 = vunpack.c.l.b16 %v573
    %v706 = vunpack.c.l.b16 %v574
    %v707 = vunpack.c.l.b16 %v575
    %v708 = vunpack.c.l.b16 %v576
    %v709 = vpack.c.b16 %v694, %v693
    %v710 = vpack.c.b16 %v696, %v695
    %v711 = vpack.c.b16 %v698, %v697
    %v712 = vpack.c.b16 %v700, %v699
    %v713 = vpack.c.b16 %v702, %v701
    %v714 = vpack.c.b16 %v704, %v703
    %v715 = vpack.c.b16 %v706, %v705
    %v716 = vpack.c.b16 %v708, %v707
    %v718 = vsel %vm308, %v709, 0
    %v721 = vsel %vm308, %v710, 0
    %v724 = vsel %vm308, %v711, 0
    %v727 = vsel %vm308, %v712, 0
    %v730 = vsel %vm308, %v713, 0
    %v733 = vsel %vm308, %v714, 0
    %v736 = vsel %vm308, %v715, 0
    %v739 = vsel %vm308, %v716, 0
    %741 = vmatprep.subr.bf16.mxu0 0
    %742 = vmatpush1.bf16.msra.mxu0 %v577
    %743 = vmatprep.subr.bf16.mxu0 0
    %744 = vmatpush1.bf16.msra.mxu0 %v578
    %745 = vmatprep.subr.bf16.mxu0 0
    %746 = vmatpush1.bf16.msra.mxu0 %v579
    %747 = vmatprep.subr.bf16.mxu0 0
    %748 = vmatpush1.bf16.msra.mxu0 %v580
    %749 = vmatprep.subr.bf16.mxu0 0
    %750 = vmatpush1.bf16.msra.mxu0 0
    %751 = vmatprep.subr.bf16.mxu0 0
    %752 = vmatpush1.bf16.msra.mxu0 0
    %753 = vmatprep.subr.bf16.mxu0 0
    %754 = vmatpush1.bf16.msra.mxu0 0
    %755 = vmatprep.subr.bf16.mxu0 0
    %756 = vmatpush1.bf16.msra.mxu0 0
    %757 = vmatprep.subr.bf16.mxu0 0
    %758 = vmatpush1.bf16.msra.mxu0 0
    %759 = vmatprep.subr.bf16.mxu0 0
    %760 = vmatpush1.bf16.msra.mxu0 0
    %761 = vmatprep.subr.bf16.mxu0 0
    %762 = vmatpush1.bf16.msra.mxu0 0
    %763 = vmatprep.subr.bf16.mxu0 0
    %764 = vmatpush1.bf16.msra.mxu0 0
    %765 = vmatprep.subr.bf16.mxu0 0
    %766 = vmatpush1.bf16.msra.mxu0 0
    %767 = vmatprep.subr.bf16.mxu0 0
    %768 = vmatpush1.bf16.msra.mxu0 0
    %769 = vmatprep.subr.bf16.mxu0 0
    %770 = vmatpush1.bf16.msra.mxu0 0
    %771 = vmatprep.subr.bf16.mxu0 0
    %772 = vmatpush1.bf16.msra.mxu0 0
    %773 = vmatprep.mubr.bf16.mxu0 0
    %774 = vmatmul.mubr.bf16.gmra.mrb[0].mxu0 %v718
    %v775 = vpop.f32.mrb[0].mxu0
    %v776 = vadd.f32 %v600, %v775
    %v777 = vpop.f32.mrb[0].mxu0
    %v778 = vpop.f32.mrb[0].mxu0
    %v779 = vadd.f32 %v605, %v778
    %v780 = vpop.f32.mrb[0].mxu0
    %781 = vmatprep.mubr.bf16.mxu0 0
    %782 = vmatmul.mubr.bf16.gmra.mrb[0].mxu0 %v721
    %v783 = vpop.f32.mrb[0].mxu0
    %v784 = vadd.f32 %v610, %v783
    %v785 = vpop.f32.mrb[0].mxu0
    %v786 = vpop.f32.mrb[0].mxu0
    %v787 = vadd.f32 %v615, %v786
    %v788 = vpop.f32.mrb[0].mxu0
    %789 = vmatprep.mubr.bf16.mxu0 0
    %790 = vmatmul.mubr.bf16.gmra.mrb[0].mxu0 %v724
    %v791 = vpop.f32.mrb[0].mxu0
    %v792 = vadd.f32 %v620, %v791
    %v793 = vpop.f32.mrb[0].mxu0
    %v794 = vpop.f32.mrb[0].mxu0
    %v795 = vadd.f32 %v625, %v794
    %v796 = vpop.f32.mrb[0].mxu0
    %797 = vmatprep.mubr.bf16.mxu0 0
    %798 = vmatmul.mubr.bf16.gmra.mrb[0].mxu0 %v727
    %v799 = vpop.f32.mrb[0].mxu0
    %v800 = vadd.f32 %v630, %v799
    %v801 = vpop.f32.mrb[0].mxu0
    %v802 = vpop.f32.mrb[0].mxu0
    %v803 = vadd.f32 %v635, %v802
    %v804 = vpop.f32.mrb[0].mxu0
    %805 = vmatprep.mubr.bf16.mxu0 0
    %806 = vmatmul.mubr.bf16.gmra.mrb[0].mxu0 %v730
    %v807 = vpop.f32.mrb[0].mxu0
    %v808 = vadd.f32 %v640, %v807
    %v809 = vpop.f32.mrb[0].mxu0
    %v810 = vpop.f32.mrb[0].mxu0
    %v811 = vadd.f32 %v645, %v810
    %v812 = vpop.f32.mrb[0].mxu0
    %813 = vmatprep.mubr.bf16.mxu0 0
    %814 = vmatmul.mubr.bf16.gmra.mrb[0].mxu0 %v733
    %v815 = vpop.f32.mrb[0].mxu0
    %v816 = vadd.f32 %v650, %v815
    %v817 = vpop.f32.mrb[0].mxu0
    %v818 = vpop.f32.mrb[0].mxu0
    %v819 = vadd.f32 %v655, %v818
    %v820 = vpop.f32.mrb[0].mxu0
    %821 = vmatprep.mubr.bf16.mxu0 0
    %822 = vmatmul.mubr.bf16.gmra.mrb[0].mxu0 %v736
    %v823 = vpop.f32.mrb[0].mxu0
    %v824 = vadd.f32 %v660, %v823
    %v825 = vpop.f32.mrb[0].mxu0
    %v826 = vpop.f32.mrb[0].mxu0
    %v827 = vadd.f32 %v665, %v826
    %v828 = vpop.f32.mrb[0].mxu0
    %829 = vmatprep.mubr.bf16.mxu0 0
    %830 = vmatmul.mubr.bf16.gmra.mrb[0].mxu0 %v739
    %v831 = vpop.f32.mrb[0].mxu0
    %v832 = vadd.f32 %v670, %v831
    %v833 = vpop.f32.mrb[0].mxu0
    %v834 = vpop.f32.mrb[0].mxu0
    %v835 = vadd.f32 %v675, %v834
    %v836 = vpop.f32.mrb[0].mxu0
    %837 = vdwg.mxu0
    %v838 = vpack.c.bf16 %v779, %v776
    %v839 = vpack.c.bf16 %v787, %v784
    %v840 = vpack.c.bf16 %v795, %v792
    %v841 = vpack.c.bf16 %v803, %v800
    %v842 = vpack.c.bf16 %v811, %v808
    %v843 = vpack.c.bf16 %v819, %v816
    %v844 = vpack.c.bf16 %v827, %v824
    %v845 = vpack.c.bf16 %v835, %v832
    %v846 = vmax.bf16 %v838, 0
    %v847 = vmax.bf16 %v839, 0
    %v848 = vmax.bf16 %v840, 0
    %v849 = vmax.bf16 %v841, 0
    %v850 = vmax.bf16 %v842, 0
    %v851 = vmax.bf16 %v843, 0
    %v852 = vmax.bf16 %v844, 0
    %v853 = vmax.bf16 %v845, 0
    %v854 = vld [vmem:[%s6] sm:$0xf]
    %v855 = vld [vmem:[%s6 + $0x4] sm:$0xf]
    %v856 = vld [vmem:[%s6 + $0x8] sm:$0xf]
    %v857 = vld [vmem:[%s6 + $0xc] sm:$0xf]
    %v858 = vld [vmem:[%s6 + $0x10] sm:$0xf]
    %v859 = vld [vmem:[%s6 + $0x14] sm:$0xf]
    %v860 = vld [vmem:[%s6 + $0x18] sm:$0xf]
    %v861 = vld [vmem:[%s6 + $0x1c] sm:$0xf]
    %v870 = vunpack.c.l.b16 %v854
    %v871 = vunpack.c.l.b16 %v855
    %v872 = vunpack.c.l.b16 %v856
    %v873 = vunpack.c.l.b16 %v857
    %v874 = vunpack.c.l.b16 %v858
    %v875 = vunpack.c.l.b16 %v859
    %v876 = vunpack.c.l.b16 %v860
    %v877 = vunpack.c.l.b16 %v861
    %v878 = vpack.c.b16 %v871, %v870
    %v879 = vpack.c.b16 %v873, %v872
    %v880 = vpack.c.b16 %v875, %v874
    %v881 = vpack.c.b16 %v877, %v876
    %886 = vmatprep.subr.bf16.mxu0 0
    %887 = vmatpush1.bf16.msra.mxu0 %v846
    %888 = vmatprep.subr.bf16.mxu0 0
    %889 = vmatpush1.bf16.msra.mxu0 %v847
    %890 = vmatprep.subr.bf16.mxu0 0
    %891 = vmatpush1.bf16.msra.mxu0 %v848
    %892 = vmatprep.subr.bf16.mxu0 0
    %893 = vmatpush1.bf16.msra.mxu0 %v849
    %894 = vmatprep.subr.bf16.mxu0 0
    %895 = vmatpush1.bf16.msra.mxu0 %v850
    %896 = vmatprep.subr.bf16.mxu0 0
    %897 = vmatpush1.bf16.msra.mxu0 %v851
    %898 = vmatprep.subr.bf16.mxu0 0
    %899 = vmatpush1.bf16.msra.mxu0 %v852
    %900 = vmatprep.subr.bf16.mxu0 0
    %901 = vmatpush1.bf16.msra.mxu0 %v853
    %902 = vmatprep.subr.bf16.mxu0 0
    %903 = vmatpush1.bf16.msra.mxu0 0
    %904 = vmatprep.subr.bf16.mxu0 0
    %905 = vmatpush1.bf16.msra.mxu0 0
    %906 = vmatprep.subr.bf16.mxu0 0
    %907 = vmatpush1.bf16.msra.mxu0 0
    %908 = vmatprep.subr.bf16.mxu0 0
    %909 = vmatpush1.bf16.msra.mxu0 0
    %910 = vmatprep.subr.bf16.mxu0 0
    %911 = vmatpush1.bf16.msra.mxu0 0
    %912 = vmatprep.subr.bf16.mxu0 0
    %913 = vmatpush1.bf16.msra.mxu0 0
    %914 = vmatprep.subr.bf16.mxu0 0
    %915 = vmatpush1.bf16.msra.mxu0 0
    %916 = vmatprep.subr.bf16.mxu0 0
    %917 = vmatpush1.bf16.msra.mxu0 0
    %918 = vmatprep.mubr.bf16.mxu0 0
    %919 = vmatmul.mubr.bf16.gmra.mrb[0].mxu0 %v878
    %v920 = vpop.f32.mrb[0].mxu0
    %v921 = vadd.f32 0.0, %v920
    %v922 = vpop.f32.mrb[0].mxu0
    %v923 = vpop.f32.mrb[0].mxu0
    %v924 = vadd.f32 0.0, %v923
    %v925 = vpop.f32.mrb[0].mxu0
    %926 = vmatprep.mubr.bf16.mxu0 0
    %927 = vmatmul.mubr.bf16.gmra.mrb[0].mxu0 %v879
    %v928 = vpop.f32.mrb[0].mxu0
    %v929 = vadd.f32 0.0, %v928
    %v930 = vpop.f32.mrb[0].mxu0
    %v931 = vpop.f32.mrb[0].mxu0
    %v932 = vadd.f32 0.0, %v931
    %v933 = vpop.f32.mrb[0].mxu0
    %934 = vmatprep.mubr.bf16.mxu0 0
    %935 = vmatmul.mubr.bf16.gmra.mrb[0].mxu0 %v880
    %v936 = vpop.f32.mrb[0].mxu0
    %v937 = vadd.f32 0.0, %v936
    %v938 = vpop.f32.mrb[0].mxu0
    %v939 = vpop.f32.mrb[0].mxu0
    %v940 = vadd.f32 0.0, %v939
    %v941 = vpop.f32.mrb[0].mxu0
    %942 = vmatprep.mubr.bf16.mxu0 0
    %943 = vmatmul.mubr.bf16.gmra.mrb[0].mxu0 %v881
    %v944 = vpop.f32.mrb[0].mxu0
    %v945 = vadd.f32 0.0, %v944
    %v946 = vpop.f32.mrb[0].mxu0
    %v947 = vpop.f32.mrb[0].mxu0
    %v948 = vadd.f32 0.0, %v947
    %v949 = vpop.f32.mrb[0].mxu0
    %950 = vdwg.mxu0
    %v951 = vadd.f32 %v553, %v921
    %v952 = vadd.f32 %v554, %v924
    %v953 = vadd.f32 %v555, %v929
    %v954 = vadd.f32 %v556, %v932
    %v955 = vadd.f32 %v557, %v937
    %v956 = vadd.f32 %v558, %v940
    %v957 = vadd.f32 %v559, %v945
    %v958 = vadd.f32 %v560, %v948
    %960 = vset.pattern.permute.xlu0 0
    %961 = vperm.xlu0 %960, %v210
    %v962 = vpop.permute.xlu0 %961
    %965 = vset.pattern.permute.xlu0 0
    %966 = vperm.xlu0 %965, %v211
    %v967 = vpop.permute.xlu0 %966
    %970 = vset.pattern.permute.xlu0 0
    %971 = vperm.xlu0 %970, %v212
    %v972 = vpop.permute.xlu0 %971
    %975 = vset.pattern.permute.xlu0 0
    %976 = vperm.xlu0 %975, %v213
    %v977 = vpop.permute.xlu0 %976
    %980 = vset.pattern.permute.xlu0 0
    %981 = vperm.xlu0 %980, %v214
    %v982 = vpop.permute.xlu0 %981
    %985 = vset.pattern.permute.xlu0 0
    %986 = vperm.xlu0 %985, %v215
    %v987 = vpop.permute.xlu0 %986
    %990 = vset.pattern.permute.xlu0 0
    %991 = vperm.xlu0 %990, %v216
    %v992 = vpop.permute.xlu0 %991
    %995 = vset.pattern.permute.xlu0 0
    %996 = vperm.xlu0 %995, %v217
    %v997 = vpop.permute.xlu0 %996
    %v999 = vadd.f32 %v951, %v962
    %v1000 = vadd.f32 %v952, %v967
    %v1001 = vadd.f32 %v953, %v972
    %v1002 = vadd.f32 %v954, %v977
    %v1003 = vadd.f32 %v955, %v982
    %v1004 = vadd.f32 %v956, %v987
    %v1005 = vadd.f32 %v957, %v992
    %v1006 = vadd.f32 %v958, %v997
    %s1007 = scalar_lea.vmem %s7, 256
    %v1008 = vld [vmem:[%s1007] sm:$0xff]
    %v1009 = vld [vmem:[%s1007 + $0x8] sm:$0xff]
    %v1010 = vld [vmem:[%s1007 + $0x10] sm:$0xff]
    %v1011 = vld [vmem:[%s1007 + $0x18] sm:$0xff]
    %v1012 = vld [vmem:[%s1007 + $0x20] sm:$0xff]
    %v1013 = vld [vmem:[%s1007 + $0x28] sm:$0xff]
    %v1014 = vld [vmem:[%s1007 + $0x30] sm:$0xff]
    %v1015 = vld [vmem:[%s1007 + $0x38] sm:$0xff]
    %s1016 = scalar_lea.vmem %s7, 320
    %v1017 = vld [vmem:[%s1016] sm:$0xff]
    %v1018 = vld [vmem:[%s1016 + $0x8] sm:$0xff]
    %v1019 = vld [vmem:[%s1016 + $0x10] sm:$0xff]
    %v1020 = vld [vmem:[%s1016 + $0x18] sm:$0xff]
    %v1021 = vld [vmem:[%s1016 + $0x20] sm:$0xff]
    %v1022 = vld [vmem:[%s1016 + $0x28] sm:$0xff]
    %v1023 = vld [vmem:[%s1016 + $0x30] sm:$0xff]
    %v1024 = vld [vmem:[%s1016 + $0x38] sm:$0xff]
    %v1025 = vsel %vm123, %v999, 0.0
    %v1026 = vsel %vm123, %v1000, 0.0
    %v1027 = vadd.f32 %v1025, %v1026
    %v1028 = vsel %vm123, %v1001, 0.0
    %v1029 = vadd.f32 %v1027, %v1028
    %v1030 = vsel %vm123, %v1002, 0.0
    %v1031 = vadd.f32 %v1029, %v1030
    %v1032 = vsel %vm123, %v1003, 0.0
    %v1033 = vadd.f32 %v1031, %v1032
    %v1034 = vsel %vm123, %v1004, 0.0
    %v1035 = vadd.f32 %v1033, %v1034
    %v1036 = vsel %vm123, %v1005, 0.0
    %v1037 = vadd.f32 %v1035, %v1036
    %v1038 = vsel %vm123, %v1006, 0.0
    %v1039 = vadd.f32 %v1037, %v1038
    %v1040 = vrot.slane %v1039, 4
    %v1041 = vadd.f32 %v1039, %v1040
    %v1042 = vrot.slane %v1041, 2
    %v1043 = vadd.f32 %v1041, %v1042
    %v1044 = vrot.slane %v1043, 1
    %v1045 = vadd.f32 %v1043, %v1044
    %v1046 = vmul.f32 %v1045, %v415
    %v1047 = vsub.f32 %v999, %v1046
    %v1048 = vsub.f32 %v1000, %v1046
    %v1049 = vsub.f32 %v1001, %v1046
    %v1050 = vsub.f32 %v1002, %v1046
    %v1051 = vsub.f32 %v1003, %v1046
    %v1052 = vsub.f32 %v1004, %v1046
    %v1053 = vsub.f32 %v1005, %v1046
    %v1054 = vsub.f32 %v1006, %v1046
    %v1055 = vmul.f32 %v1047, %v1047
    %v1056 = vmul.f32 %v1048, %v1048
    %v1057 = vmul.f32 %v1049, %v1049
    %v1058 = vmul.f32 %v1050, %v1050
    %v1059 = vmul.f32 %v1051, %v1051
    %v1060 = vmul.f32 %v1052, %v1052
    %v1061 = vmul.f32 %v1053, %v1053
    %v1062 = vmul.f32 %v1054, %v1054
    %v1063 = vsel %vm123, %v1055, 0.0
    %v1064 = vsel %vm123, %v1056, 0.0
    %v1065 = vadd.f32 %v1063, %v1064
    %v1066 = vsel %vm123, %v1057, 0.0
    %v1067 = vadd.f32 %v1065, %v1066
    %v1068 = vsel %vm123, %v1058, 0.0
    %v1069 = vadd.f32 %v1067, %v1068
    %v1070 = vsel %vm123, %v1059, 0.0
    %v1071 = vadd.f32 %v1069, %v1070
    %v1072 = vsel %vm123, %v1060, 0.0
    %v1073 = vadd.f32 %v1071, %v1072
    %v1074 = vsel %vm123, %v1061, 0.0
    %v1075 = vadd.f32 %v1073, %v1074
    %v1076 = vsel %vm123, %v1062, 0.0
    %v1077 = vadd.f32 %v1075, %v1076
    %v1078 = vrot.slane %v1077, 4
    %v1079 = vadd.f32 %v1077, %v1078
    %v1080 = vrot.slane %v1079, 2
    %v1081 = vadd.f32 %v1079, %v1080
    %v1082 = vrot.slane %v1081, 1
    %v1083 = vadd.f32 %v1081, %v1082
    %v1084 = vmul.f32 %v1083, %v415
    %v1085 = vadd.f32 %v1084, 1e-05
    %v1086 = vrsqrt.pop %v1085
    %v1087 = vmul.f32 %v1047, %v1086
    %v1088 = vmul.f32 %v1048, %v1086
    %v1089 = vmul.f32 %v1049, %v1086
    %v1090 = vmul.f32 %v1050, %v1086
    %v1091 = vmul.f32 %v1051, %v1086
    %v1092 = vmul.f32 %v1052, %v1086
    %v1093 = vmul.f32 %v1053, %v1086
    %v1094 = vmul.f32 %v1054, %v1086
    %1096 = vset.pattern.permute.xlu0 0
    %1097 = vperm.xlu0 %1096, %v1008
    %v1098 = vpop.permute.xlu0 %1097
    %1101 = vset.pattern.permute.xlu0 0
    %1102 = vperm.xlu0 %1101, %v1009
    %v1103 = vpop.permute.xlu0 %1102
    %1106 = vset.pattern.permute.xlu0 0
    %1107 = vperm.xlu0 %1106, %v1010
    %v1108 = vpop.permute.xlu0 %1107
    %1111 = vset.pattern.permute.xlu0 0
    %1112 = vperm.xlu0 %1111, %v1011
    %v1113 = vpop.permute.xlu0 %1112
    %1116 = vset.pattern.permute.xlu0 0
    %1117 = vperm.xlu0 %1116, %v1012
    %v1118 = vpop.permute.xlu0 %1117
    %1121 = vset.pattern.permute.xlu0 0
    %1122 = vperm.xlu0 %1121, %v1013
    %v1123 = vpop.permute.xlu0 %1122
    %1126 = vset.pattern.permute.xlu0 0
    %1127 = vperm.xlu0 %1126, %v1014
    %v1128 = vpop.permute.xlu0 %1127
    %1131 = vset.pattern.permute.xlu0 0
    %1132 = vperm.xlu0 %1131, %v1015
    %v1133 = vpop.permute.xlu0 %1132
    %v1135 = vmul.f32 %v1087, %v1098
    %v1136 = vmul.f32 %v1088, %v1103
    %v1137 = vmul.f32 %v1089, %v1108
    %v1138 = vmul.f32 %v1090, %v1113
    %v1139 = vmul.f32 %v1091, %v1118
    %v1140 = vmul.f32 %v1092, %v1123
    %v1141 = vmul.f32 %v1093, %v1128
    %v1142 = vmul.f32 %v1094, %v1133
    %1144 = vset.pattern.permute.xlu0 0
    %1145 = vperm.xlu0 %1144, %v1017
    %v1146 = vpop.permute.xlu0 %1145
    %1149 = vset.pattern.permute.xlu0 0
    %1150 = vperm.xlu0 %1149, %v1018
    %v1151 = vpop.permute.xlu0 %1150
    %1154 = vset.pattern.permute.xlu0 0
    %1155 = vperm.xlu0 %1154, %v1019
    %v1156 = vpop.permute.xlu0 %1155
    %1159 = vset.pattern.permute.xlu0 0
    %1160 = vperm.xlu0 %1159, %v1020
    %v1161 = vpop.permute.xlu0 %1160
    %1164 = vset.pattern.permute.xlu0 0
    %1165 = vperm.xlu0 %1164, %v1021
    %v1166 = vpop.permute.xlu0 %1165
    %1169 = vset.pattern.permute.xlu0 0
    %1170 = vperm.xlu0 %1169, %v1022
    %v1171 = vpop.permute.xlu0 %1170
    %1174 = vset.pattern.permute.xlu0 0
    %1175 = vperm.xlu0 %1174, %v1023
    %v1176 = vpop.permute.xlu0 %1175
    %1179 = vset.pattern.permute.xlu0 0
    %1180 = vperm.xlu0 %1179, %v1024
    %v1181 = vpop.permute.xlu0 %1180
    %v1183 = vadd.f32 %v1135, %v1146
    %v1184 = vadd.f32 %v1136, %v1151
    %v1185 = vadd.f32 %v1137, %v1156
    %v1186 = vadd.f32 %v1138, %v1161
    %v1187 = vadd.f32 %v1139, %v1166
    %v1188 = vadd.f32 %v1140, %v1171
    %v1189 = vadd.f32 %v1141, %v1176
    %v1190 = vadd.f32 %v1142, %v1181
    %s1191 = scalar_lea.vmem %s7, 384
    %v1192 = vld [vmem:[%s1191] sm:$0xff]
    %v1193 = vld [vmem:[%s1191 + $0x8] sm:$0xff]
    %v1194 = vld [vmem:[%s1191 + $0x10] sm:$0xff]
    %v1195 = vld [vmem:[%s1191 + $0x18] sm:$0xff]
    %v1196 = vld [vmem:[%s1191 + $0x20] sm:$0xff]
    %v1197 = vld [vmem:[%s1191 + $0x28] sm:$0xff]
    %v1198 = vld [vmem:[%s1191 + $0x30] sm:$0xff]
    %v1199 = vld [vmem:[%s1191 + $0x38] sm:$0xff]
    %s1200 = scalar_lea.vmem %s7, 448
    %v1201 = vld [vmem:[%s1200] sm:$0xff]
    %v1202 = vld [vmem:[%s1200 + $0x8] sm:$0xff]
    %v1203 = vld [vmem:[%s1200 + $0x10] sm:$0xff]
    %v1204 = vld [vmem:[%s1200 + $0x18] sm:$0xff]
    %v1205 = vld [vmem:[%s1200 + $0x20] sm:$0xff]
    %v1206 = vld [vmem:[%s1200 + $0x28] sm:$0xff]
    %v1207 = vld [vmem:[%s1200 + $0x30] sm:$0xff]
    %v1208 = vld [vmem:[%s1200 + $0x38] sm:$0xff]
    %s1209 = scalar_lea.vmem %s7, 512
    %v1210 = vld [vmem:[%s1209] sm:$0xff]
    %v1211 = vld [vmem:[%s1209 + $0x8] sm:$0xff]
    %v1212 = vld [vmem:[%s1209 + $0x10] sm:$0xff]
    %v1213 = vld [vmem:[%s1209 + $0x18] sm:$0xff]
    %v1214 = vld [vmem:[%s1209 + $0x20] sm:$0xff]
    %v1215 = vld [vmem:[%s1209 + $0x28] sm:$0xff]
    %v1216 = vld [vmem:[%s1209 + $0x30] sm:$0xff]
    %v1217 = vld [vmem:[%s1209 + $0x38] sm:$0xff]
    %s1218 = scalar_lea.vmem %s7, 576
    %v1219 = vld [vmem:[%s1218] sm:$0xff]
    %v1220 = vld [vmem:[%s1218 + $0x8] sm:$0xff]
    %v1221 = vld [vmem:[%s1218 + $0x10] sm:$0xff]
    %v1222 = vld [vmem:[%s1218 + $0x18] sm:$0xff]
    %v1223 = vld [vmem:[%s1218 + $0x20] sm:$0xff]
    %v1224 = vld [vmem:[%s1218 + $0x28] sm:$0xff]
    %v1225 = vld [vmem:[%s1218 + $0x30] sm:$0xff]
    %v1226 = vld [vmem:[%s1218 + $0x38] sm:$0xff]
    %s1227 = scalar_lea.vmem %s3, 32
    %v1228 = vld [vmem:[%s1227] sm:$0xf]
    %v1229 = vld [vmem:[%s1227 + $0x4] sm:$0xf]
    %v1230 = vld [vmem:[%s1227 + $0x8] sm:$0xf]
    %v1231 = vld [vmem:[%s1227 + $0xc] sm:$0xf]
    %v1232 = vld [vmem:[%s1227 + $0x10] sm:$0xf]
    %v1233 = vld [vmem:[%s1227 + $0x14] sm:$0xf]
    %v1234 = vld [vmem:[%s1227 + $0x18] sm:$0xf]
    %v1235 = vld [vmem:[%s1227 + $0x1c] sm:$0xf]
    %v1236 = vpack.c.bf16 %v1184, %v1183
    %v1237 = vpack.c.bf16 %v1186, %v1185
    %v1238 = vpack.c.bf16 %v1188, %v1187
    %v1239 = vpack.c.bf16 %v1190, %v1189
    %1241 = vset.pattern.permute.xlu0 0
    %1242 = vperm.xlu0 %1241, %v1192
    %v1243 = vpop.permute.xlu0 %1242
    %1246 = vset.pattern.permute.xlu0 0
    %1247 = vperm.xlu0 %1246, %v1193
    %v1248 = vpop.permute.xlu0 %1247
    %1251 = vset.pattern.permute.xlu0 0
    %1252 = vperm.xlu0 %1251, %v1194
    %v1253 = vpop.permute.xlu0 %1252
    %1256 = vset.pattern.permute.xlu0 0
    %1257 = vperm.xlu0 %1256, %v1195
    %v1258 = vpop.permute.xlu0 %1257
    %1261 = vset.pattern.permute.xlu0 0
    %1262 = vperm.xlu0 %1261, %v1196
    %v1263 = vpop.permute.xlu0 %1262
    %1266 = vset.pattern.permute.xlu0 0
    %1267 = vperm.xlu0 %1266, %v1197
    %v1268 = vpop.permute.xlu0 %1267
    %1271 = vset.pattern.permute.xlu0 0
    %1272 = vperm.xlu0 %1271, %v1198
    %v1273 = vpop.permute.xlu0 %1272
    %1276 = vset.pattern.permute.xlu0 0
    %1277 = vperm.xlu0 %1276, %v1199
    %v1278 = vpop.permute.xlu0 %1277
    %v1288 = vunpack.c.l.b16 %v1228
    %v1289 = vunpack.c.l.b16 %v1229
    %v1290 = vunpack.c.l.b16 %v1230
    %v1291 = vunpack.c.l.b16 %v1231
    %v1292 = vunpack.c.l.b16 %v1232
    %v1293 = vunpack.c.l.b16 %v1233
    %v1294 = vunpack.c.l.b16 %v1234
    %v1295 = vunpack.c.l.b16 %v1235
    %v1296 = vpack.c.b16 %v1289, %v1288
    %v1297 = vpack.c.b16 %v1291, %v1290
    %v1298 = vpack.c.b16 %v1293, %v1292
    %v1299 = vpack.c.b16 %v1295, %v1294
    %v1301 = vsel %vm308, %v1296, 0
    %v1304 = vsel %vm308, %v1297, 0
    %v1307 = vsel %vm308, %v1298, 0
    %v1310 = vsel %vm308, %v1299, 0
    %1312 = vmatprep.subr.bf16.mxu0 0
    %1313 = vmatpush1.bf16.msra.mxu0 %v1236
    %1314 = vmatprep.subr.bf16.mxu0 0
    %1315 = vmatpush1.bf16.msra.mxu0 %v1237
    %1316 = vmatprep.subr.bf16.mxu0 0
    %1317 = vmatpush1.bf16.msra.mxu0 %v1238
    %1318 = vmatprep.subr.bf16.mxu0 0
    %1319 = vmatpush1.bf16.msra.mxu0 %v1239
    %1320 = vmatprep.subr.bf16.mxu0 0
    %1321 = vmatpush1.bf16.msra.mxu0 0
    %1322 = vmatprep.subr.bf16.mxu0 0
    %1323 = vmatpush1.bf16.msra.mxu0 0
    %1324 = vmatprep.subr.bf16.mxu0 0
    %1325 = vmatpush1.bf16.msra.mxu0 0
    %1326 = vmatprep.subr.bf16.mxu0 0
    %1327 = vmatpush1.bf16.msra.mxu0 0
    %1328 = vmatprep.subr.bf16.mxu0 0
    %1329 = vmatpush1.bf16.msra.mxu0 0
    %1330 = vmatprep.subr.bf16.mxu0 0
    %1331 = vmatpush1.bf16.msra.mxu0 0
    %1332 = vmatprep.subr.bf16.mxu0 0
    %1333 = vmatpush1.bf16.msra.mxu0 0
    %1334 = vmatprep.subr.bf16.mxu0 0
    %1335 = vmatpush1.bf16.msra.mxu0 0
    %1336 = vmatprep.subr.bf16.mxu0 0
    %1337 = vmatpush1.bf16.msra.mxu0 0
    %1338 = vmatprep.subr.bf16.mxu0 0
    %1339 = vmatpush1.bf16.msra.mxu0 0
    %1340 = vmatprep.subr.bf16.mxu0 0
    %1341 = vmatpush1.bf16.msra.mxu0 0
    %1342 = vmatprep.subr.bf16.mxu0 0
    %1343 = vmatpush1.bf16.msra.mxu0 0
    %1344 = vmatprep.mubr.bf16.mxu0 0
    %1345 = vmatmul.mubr.bf16.gmra.mrb[0].mxu0 %v1301
    %v1346 = vpop.f32.mrb[0].mxu0
    %v1347 = vadd.f32 %v1243, %v1346
    %v1348 = vpop.f32.mrb[0].mxu0
    %v1349 = vpop.f32.mrb[0].mxu0
    %v1350 = vadd.f32 %v1248, %v1349
    %v1351 = vpop.f32.mrb[0].mxu0
    %1352 = vmatprep.mubr.bf16.mxu0 0
    %1353 = vmatmul.mubr.bf16.gmra.mrb[0].mxu0 %v1304
    %v1354 = vpop.f32.mrb[0].mxu0
    %v1355 = vadd.f32 %v1253, %v1354
    %v1356 = vpop.f32.mrb[0].mxu0
    %v1357 = vpop.f32.mrb[0].mxu0
    %v1358 = vadd.f32 %v1258, %v1357
    %v1359 = vpop.f32.mrb[0].mxu0
    %1360 = vmatprep.mubr.bf16.mxu0 0
    %1361 = vmatmul.mubr.bf16.gmra.mrb[0].mxu0 %v1307
    %v1362 = vpop.f32.mrb[0].mxu0
    %v1363 = vadd.f32 %v1263, %v1362
    %v1364 = vpop.f32.mrb[0].mxu0
    %v1365 = vpop.f32.mrb[0].mxu0
    %v1366 = vadd.f32 %v1268, %v1365
    %v1367 = vpop.f32.mrb[0].mxu0
    %1368 = vmatprep.mubr.bf16.mxu0 0
    %1369 = vmatmul.mubr.bf16.gmra.mrb[0].mxu0 %v1310
    %v1370 = vpop.f32.mrb[0].mxu0
    %v1371 = vadd.f32 %v1273, %v1370
    %v1372 = vpop.f32.mrb[0].mxu0
    %v1373 = vpop.f32.mrb[0].mxu0
    %v1374 = vadd.f32 %v1278, %v1373
    %v1375 = vpop.f32.mrb[0].mxu0
    %1376 = vdwg.mxu0
    %v1377 = vadd.f32 %v1183, %v1347
    %v1378 = vadd.f32 %v1184, %v1350
    %v1379 = vadd.f32 %v1185, %v1355
    %v1380 = vadd.f32 %v1186, %v1358
    %v1381 = vadd.f32 %v1187, %v1363
    %v1382 = vadd.f32 %v1188, %v1366
    %v1383 = vadd.f32 %v1189, %v1371
    %v1384 = vadd.f32 %v1190, %v1374
    %v1385 = vsel %vm123, %v1377, 0.0
    %v1386 = vsel %vm123, %v1378, 0.0
    %v1387 = vadd.f32 %v1385, %v1386
    %v1388 = vsel %vm123, %v1379, 0.0
    %v1389 = vadd.f32 %v1387, %v1388
    %v1390 = vsel %vm123, %v1380, 0.0
    %v1391 = vadd.f32 %v1389, %v1390
    %v1392 = vsel %vm123, %v1381, 0.0
    %v1393 = vadd.f32 %v1391, %v1392
    %v1394 = vsel %vm123, %v1382, 0.0
    %v1395 = vadd.f32 %v1393, %v1394
    %v1396 = vsel %vm123, %v1383, 0.0
    %v1397 = vadd.f32 %v1395, %v1396
    %v1398 = vsel %vm123, %v1384, 0.0
    %v1399 = vadd.f32 %v1397, %v1398
    %v1400 = vrot.slane %v1399, 4
    %v1401 = vadd.f32 %v1399, %v1400
    %v1402 = vrot.slane %v1401, 2
    %v1403 = vadd.f32 %v1401, %v1402
    %v1404 = vrot.slane %v1403, 1
    %v1405 = vadd.f32 %v1403, %v1404
    %v1406 = vmul.f32 %v1405, %v415
    %v1407 = vsub.f32 %v1377, %v1406
    %v1408 = vsub.f32 %v1378, %v1406
    %v1409 = vsub.f32 %v1379, %v1406
    %v1410 = vsub.f32 %v1380, %v1406
    %v1411 = vsub.f32 %v1381, %v1406
    %v1412 = vsub.f32 %v1382, %v1406
    %v1413 = vsub.f32 %v1383, %v1406
    %v1414 = vsub.f32 %v1384, %v1406
    %v1415 = vmul.f32 %v1407, %v1407
    %v1416 = vmul.f32 %v1408, %v1408
    %v1417 = vmul.f32 %v1409, %v1409
    %v1418 = vmul.f32 %v1410, %v1410
    %v1419 = vmul.f32 %v1411, %v1411
    %v1420 = vmul.f32 %v1412, %v1412
    %v1421 = vmul.f32 %v1413, %v1413
    %v1422 = vmul.f32 %v1414, %v1414
    %v1423 = vsel %vm123, %v1415, 0.0
    %v1424 = vsel %vm123, %v1416, 0.0
    %v1425 = vadd.f32 %v1423, %v1424
    %v1426 = vsel %vm123, %v1417, 0.0
    %v1427 = vadd.f32 %v1425, %v1426
    %v1428 = vsel %vm123, %v1418, 0.0
    %v1429 = vadd.f32 %v1427, %v1428
    %v1430 = vsel %vm123, %v1419, 0.0
    %v1431 = vadd.f32 %v1429, %v1430
    %v1432 = vsel %vm123, %v1420, 0.0
    %v1433 = vadd.f32 %v1431, %v1432
    %v1434 = vsel %vm123, %v1421, 0.0
    %v1435 = vadd.f32 %v1433, %v1434
    %v1436 = vsel %vm123, %v1422, 0.0
    %v1437 = vadd.f32 %v1435, %v1436
    %v1438 = vrot.slane %v1437, 4
    %v1439 = vadd.f32 %v1437, %v1438
    %v1440 = vrot.slane %v1439, 2
    %v1441 = vadd.f32 %v1439, %v1440
    %v1442 = vrot.slane %v1441, 1
    %v1443 = vadd.f32 %v1441, %v1442
    %v1444 = vmul.f32 %v1443, %v415
    %v1445 = vadd.f32 %v1444, 1e-05
    %v1446 = vrsqrt.pop %v1445
    %v1447 = vmul.f32 %v1407, %v1446
    %v1448 = vmul.f32 %v1408, %v1446
    %v1449 = vmul.f32 %v1409, %v1446
    %v1450 = vmul.f32 %v1410, %v1446
    %v1451 = vmul.f32 %v1411, %v1446
    %v1452 = vmul.f32 %v1412, %v1446
    %v1453 = vmul.f32 %v1413, %v1446
    %v1454 = vmul.f32 %v1414, %v1446
    %1456 = vset.pattern.permute.xlu0 0
    %1457 = vperm.xlu0 %1456, %v1210
    %v1458 = vpop.permute.xlu0 %1457
    %1461 = vset.pattern.permute.xlu0 0
    %1462 = vperm.xlu0 %1461, %v1211
    %v1463 = vpop.permute.xlu0 %1462
    %1466 = vset.pattern.permute.xlu0 0
    %1467 = vperm.xlu0 %1466, %v1212
    %v1468 = vpop.permute.xlu0 %1467
    %1471 = vset.pattern.permute.xlu0 0
    %1472 = vperm.xlu0 %1471, %v1213
    %v1473 = vpop.permute.xlu0 %1472
    %1476 = vset.pattern.permute.xlu0 0
    %1477 = vperm.xlu0 %1476, %v1214
    %v1478 = vpop.permute.xlu0 %1477
    %1481 = vset.pattern.permute.xlu0 0
    %1482 = vperm.xlu0 %1481, %v1215
    %v1483 = vpop.permute.xlu0 %1482
    %1486 = vset.pattern.permute.xlu0 0
    %1487 = vperm.xlu0 %1486, %v1216
    %v1488 = vpop.permute.xlu0 %1487
    %1491 = vset.pattern.permute.xlu0 0
    %1492 = vperm.xlu0 %1491, %v1217
    %v1493 = vpop.permute.xlu0 %1492
    %v1495 = vmul.f32 %v1447, %v1458
    %v1496 = vmul.f32 %v1448, %v1463
    %v1497 = vmul.f32 %v1449, %v1468
    %v1498 = vmul.f32 %v1450, %v1473
    %v1499 = vmul.f32 %v1451, %v1478
    %v1500 = vmul.f32 %v1452, %v1483
    %v1501 = vmul.f32 %v1453, %v1488
    %v1502 = vmul.f32 %v1454, %v1493
    %1504 = vset.pattern.permute.xlu0 0
    %1505 = vperm.xlu0 %1504, %v1219
    %v1506 = vpop.permute.xlu0 %1505
    %1509 = vset.pattern.permute.xlu0 0
    %1510 = vperm.xlu0 %1509, %v1220
    %v1511 = vpop.permute.xlu0 %1510
    %1514 = vset.pattern.permute.xlu0 0
    %1515 = vperm.xlu0 %1514, %v1221
    %v1516 = vpop.permute.xlu0 %1515
    %1519 = vset.pattern.permute.xlu0 0
    %1520 = vperm.xlu0 %1519, %v1222
    %v1521 = vpop.permute.xlu0 %1520
    %1524 = vset.pattern.permute.xlu0 0
    %1525 = vperm.xlu0 %1524, %v1223
    %v1526 = vpop.permute.xlu0 %1525
    %1529 = vset.pattern.permute.xlu0 0
    %1530 = vperm.xlu0 %1529, %v1224
    %v1531 = vpop.permute.xlu0 %1530
    %1534 = vset.pattern.permute.xlu0 0
    %1535 = vperm.xlu0 %1534, %v1225
    %v1536 = vpop.permute.xlu0 %1535
    %1539 = vset.pattern.permute.xlu0 0
    %1540 = vperm.xlu0 %1539, %v1226
    %v1541 = vpop.permute.xlu0 %1540
    %v1543 = vadd.f32 %v1495, %v1506
    %v1544 = vadd.f32 %v1496, %v1511
    %v1545 = vadd.f32 %v1497, %v1516
    %v1546 = vadd.f32 %v1498, %v1521
    %v1547 = vadd.f32 %v1499, %v1526
    %v1548 = vadd.f32 %v1500, %v1531
    %v1549 = vadd.f32 %v1501, %v1536
    %v1550 = vadd.f32 %v1502, %v1541
    %s1551 = scalar_lea.vmem %s4, 64
    %v1552 = vld [vmem:[%s1551] sm:$0xf]
    %v1553 = vld [vmem:[%s1551 + $0x4] sm:$0xf]
    %v1554 = vld [vmem:[%s1551 + $0x8] sm:$0xf]
    %v1555 = vld [vmem:[%s1551 + $0xc] sm:$0xf]
    %v1556 = vld [vmem:[%s1551 + $0x10] sm:$0xf]
    %v1557 = vld [vmem:[%s1551 + $0x14] sm:$0xf]
    %v1558 = vld [vmem:[%s1551 + $0x18] sm:$0xf]
    %v1559 = vld [vmem:[%s1551 + $0x1c] sm:$0xf]
    %v1560 = vld [vmem:[%s1551 + $0x20] sm:$0xf]
    %v1561 = vld [vmem:[%s1551 + $0x24] sm:$0xf]
    %v1562 = vld [vmem:[%s1551 + $0x28] sm:$0xf]
    %v1563 = vld [vmem:[%s1551 + $0x2c] sm:$0xf]
    %v1564 = vld [vmem:[%s1551 + $0x30] sm:$0xf]
    %v1565 = vld [vmem:[%s1551 + $0x34] sm:$0xf]
    %v1566 = vld [vmem:[%s1551 + $0x38] sm:$0xf]
    %v1567 = vld [vmem:[%s1551 + $0x3c] sm:$0xf]
    %v1568 = vpack.c.bf16 %v1544, %v1543
    %v1569 = vpack.c.bf16 %v1546, %v1545
    %v1570 = vpack.c.bf16 %v1548, %v1547
    %v1571 = vpack.c.bf16 %v1550, %v1549
    %s1572 = scalar_lea.vmem %s5, 128
    %v1573 = vld [vmem:[%s1572] sm:$0xff]
    %v1574 = vld [vmem:[%s1572 + $0x8] sm:$0xff]
    %v1575 = vld [vmem:[%s1572 + $0x10] sm:$0xff]
    %v1576 = vld [vmem:[%s1572 + $0x18] sm:$0xff]
    %v1577 = vld [vmem:[%s1572 + $0x20] sm:$0xff]
    %v1578 = vld [vmem:[%s1572 + $0x28] sm:$0xff]
    %v1579 = vld [vmem:[%s1572 + $0x30] sm:$0xff]
    %v1580 = vld [vmem:[%s1572 + $0x38] sm:$0xff]
    %v1581 = vld [vmem:[%s1572 + $0x40] sm:$0xff]
    %v1582 = vld [vmem:[%s1572 + $0x48] sm:$0xff]
    %v1583 = vld [vmem:[%s1572 + $0x50] sm:$0xff]
    %v1584 = vld [vmem:[%s1572 + $0x58] sm:$0xff]
    %v1585 = vld [vmem:[%s1572 + $0x60] sm:$0xff]
    %v1586 = vld [vmem:[%s1572 + $0x68] sm:$0xff]
    %v1587 = vld [vmem:[%s1572 + $0x70] sm:$0xff]
    %v1588 = vld [vmem:[%s1572 + $0x78] sm:$0xff]
    %1590 = vset.pattern.permute.xlu0 0
    %1591 = vperm.xlu0 %1590, %v1573
    %v1592 = vpop.permute.xlu0 %1591
    %1595 = vset.pattern.permute.xlu0 0
    %1596 = vperm.xlu0 %1595, %v1574
    %v1597 = vpop.permute.xlu0 %1596
    %1600 = vset.pattern.permute.xlu0 0
    %1601 = vperm.xlu0 %1600, %v1575
    %v1602 = vpop.permute.xlu0 %1601
    %1605 = vset.pattern.permute.xlu0 0
    %1606 = vperm.xlu0 %1605, %v1576
    %v1607 = vpop.permute.xlu0 %1606
    %1610 = vset.pattern.permute.xlu0 0
    %1611 = vperm.xlu0 %1610, %v1577
    %v1612 = vpop.permute.xlu0 %1611
    %1615 = vset.pattern.permute.xlu0 0
    %1616 = vperm.xlu0 %1615, %v1578
    %v1617 = vpop.permute.xlu0 %1616
    %1620 = vset.pattern.permute.xlu0 0
    %1621 = vperm.xlu0 %1620, %v1579
    %v1622 = vpop.permute.xlu0 %1621
    %1625 = vset.pattern.permute.xlu0 0
    %1626 = vperm.xlu0 %1625, %v1580
    %v1627 = vpop.permute.xlu0 %1626
    %1630 = vset.pattern.permute.xlu0 0
    %1631 = vperm.xlu0 %1630, %v1581
    %v1632 = vpop.permute.xlu0 %1631
    %1635 = vset.pattern.permute.xlu0 0
    %1636 = vperm.xlu0 %1635, %v1582
    %v1637 = vpop.permute.xlu0 %1636
    %1640 = vset.pattern.permute.xlu0 0
    %1641 = vperm.xlu0 %1640, %v1583
    %v1642 = vpop.permute.xlu0 %1641
    %1645 = vset.pattern.permute.xlu0 0
    %1646 = vperm.xlu0 %1645, %v1584
    %v1647 = vpop.permute.xlu0 %1646
    %1650 = vset.pattern.permute.xlu0 0
    %1651 = vperm.xlu0 %1650, %v1585
    %v1652 = vpop.permute.xlu0 %1651
    %1655 = vset.pattern.permute.xlu0 0
    %1656 = vperm.xlu0 %1655, %v1586
    %v1657 = vpop.permute.xlu0 %1656
    %1660 = vset.pattern.permute.xlu0 0
    %1661 = vperm.xlu0 %1660, %v1587
    %v1662 = vpop.permute.xlu0 %1661
    %1665 = vset.pattern.permute.xlu0 0
    %1666 = vperm.xlu0 %1665, %v1588
    %v1667 = vpop.permute.xlu0 %1666
    %v1685 = vunpack.c.l.b16 %v1552
    %v1686 = vunpack.c.l.b16 %v1553
    %v1687 = vunpack.c.l.b16 %v1554
    %v1688 = vunpack.c.l.b16 %v1555
    %v1689 = vunpack.c.l.b16 %v1556
    %v1690 = vunpack.c.l.b16 %v1557
    %v1691 = vunpack.c.l.b16 %v1558
    %v1692 = vunpack.c.l.b16 %v1559
    %v1693 = vunpack.c.l.b16 %v1560
    %v1694 = vunpack.c.l.b16 %v1561
    %v1695 = vunpack.c.l.b16 %v1562
    %v1696 = vunpack.c.l.b16 %v1563
    %v1697 = vunpack.c.l.b16 %v1564
    %v1698 = vunpack.c.l.b16 %v1565
    %v1699 = vunpack.c.l.b16 %v1566
    %v1700 = vunpack.c.l.b16 %v1567
    %v1701 = vpack.c.b16 %v1686, %v1685
    %v1702 = vpack.c.b16 %v1688, %v1687
    %v1703 = vpack.c.b16 %v1690, %v1689
    %v1704 = vpack.c.b16 %v1692, %v1691
    %v1705 = vpack.c.b16 %v1694, %v1693
    %v1706 = vpack.c.b16 %v1696, %v1695
    %v1707 = vpack.c.b16 %v1698, %v1697
    %v1708 = vpack.c.b16 %v1700, %v1699
    %v1710 = vsel %vm308, %v1701, 0
    %v1713 = vsel %vm308, %v1702, 0
    %v1716 = vsel %vm308, %v1703, 0
    %v1719 = vsel %vm308, %v1704, 0
    %v1722 = vsel %vm308, %v1705, 0
    %v1725 = vsel %vm308, %v1706, 0
    %v1728 = vsel %vm308, %v1707, 0
    %v1731 = vsel %vm308, %v1708, 0
    %1733 = vmatprep.subr.bf16.mxu0 0
    %1734 = vmatpush1.bf16.msra.mxu0 %v1568
    %1735 = vmatprep.subr.bf16.mxu0 0
    %1736 = vmatpush1.bf16.msra.mxu0 %v1569
    %1737 = vmatprep.subr.bf16.mxu0 0
    %1738 = vmatpush1.bf16.msra.mxu0 %v1570
    %1739 = vmatprep.subr.bf16.mxu0 0
    %1740 = vmatpush1.bf16.msra.mxu0 %v1571
    %1741 = vmatprep.subr.bf16.mxu0 0
    %1742 = vmatpush1.bf16.msra.mxu0 0
    %1743 = vmatprep.subr.bf16.mxu0 0
    %1744 = vmatpush1.bf16.msra.mxu0 0
    %1745 = vmatprep.subr.bf16.mxu0 0
    %1746 = vmatpush1.bf16.msra.mxu0 0
    %1747 = vmatprep.subr.bf16.mxu0 0
    %1748 = vmatpush1.bf16.msra.mxu0 0
    %1749 = vmatprep.subr.bf16.mxu0 0
    %1750 = vmatpush1.bf16.msra.mxu0 0
    %1751 = vmatprep.subr.bf16.mxu0 0
    %1752 = vmatpush1.bf16.msra.mxu0 0
    %1753 = vmatprep.subr.bf16.mxu0 0
    %1754 = vmatpush1.bf16.msra.mxu0 0
    %1755 = vmatprep.subr.bf16.mxu0 0
    %1756 = vmatpush1.bf16.msra.mxu0 0
    %1757 = vmatprep.subr.bf16.mxu0 0
    %1758 = vmatpush1.bf16.msra.mxu0 0
    %1759 = vmatprep.subr.bf16.mxu0 0
    %1760 = vmatpush1.bf16.msra.mxu0 0
    %1761 = vmatprep.subr.bf16.mxu0 0
    %1762 = vmatpush1.bf16.msra.mxu0 0
    %1763 = vmatprep.subr.bf16.mxu0 0
    %1764 = vmatpush1.bf16.msra.mxu0 0
    %1765 = vmatprep.mubr.bf16.mxu0 0
    %1766 = vmatmul.mubr.bf16.gmra.mrb[0].mxu0 %v1710
    %v1767 = vpop.f32.mrb[0].mxu0
    %v1768 = vadd.f32 %v1592, %v1767
    %v1769 = vpop.f32.mrb[0].mxu0
    %v1770 = vpop.f32.mrb[0].mxu0
    %v1771 = vadd.f32 %v1597, %v1770
    %v1772 = vpop.f32.mrb[0].mxu0
    %1773 = vmatprep.mubr.bf16.mxu0 0
    %1774 = vmatmul.mubr.bf16.gmra.mrb[0].mxu0 %v1713
    %v1775 = vpop.f32.mrb[0].mxu0
    %v1776 = vadd.f32 %v1602, %v1775
    %v1777 = vpop.f32.mrb[0].mxu0
    %v1778 = vpop.f32.mrb[0].mxu0
    %v1779 = vadd.f32 %v1607, %v1778
    %v1780 = vpop.f32.mrb[0].mxu0
    %1781 = vmatprep.mubr.bf16.mxu0 0
    %1782 = vmatmul.mubr.bf16.gmra.mrb[0].mxu0 %v1716
    %v1783 = vpop.f32.mrb[0].mxu0
    %v1784 = vadd.f32 %v1612, %v1783
    %v1785 = vpop.f32.mrb[0].mxu0
    %v1786 = vpop.f32.mrb[0].mxu0
    %v1787 = vadd.f32 %v1617, %v1786
    %v1788 = vpop.f32.mrb[0].mxu0
    %1789 = vmatprep.mubr.bf16.mxu0 0
    %1790 = vmatmul.mubr.bf16.gmra.mrb[0].mxu0 %v1719
    %v1791 = vpop.f32.mrb[0].mxu0
    %v1792 = vadd.f32 %v1622, %v1791
    %v1793 = vpop.f32.mrb[0].mxu0
    %v1794 = vpop.f32.mrb[0].mxu0
    %v1795 = vadd.f32 %v1627, %v1794
    %v1796 = vpop.f32.mrb[0].mxu0
    %1797 = vmatprep.mubr.bf16.mxu0 0
    %1798 = vmatmul.mubr.bf16.gmra.mrb[0].mxu0 %v1722
    %v1799 = vpop.f32.mrb[0].mxu0
    %v1800 = vadd.f32 %v1632, %v1799
    %v1801 = vpop.f32.mrb[0].mxu0
    %v1802 = vpop.f32.mrb[0].mxu0
    %v1803 = vadd.f32 %v1637, %v1802
    %v1804 = vpop.f32.mrb[0].mxu0
    %1805 = vmatprep.mubr.bf16.mxu0 0
    %1806 = vmatmul.mubr.bf16.gmra.mrb[0].mxu0 %v1725
    %v1807 = vpop.f32.mrb[0].mxu0
    %v1808 = vadd.f32 %v1642, %v1807
    %v1809 = vpop.f32.mrb[0].mxu0
    %v1810 = vpop.f32.mrb[0].mxu0
    %v1811 = vadd.f32 %v1647, %v1810
    %v1812 = vpop.f32.mrb[0].mxu0
    %1813 = vmatprep.mubr.bf16.mxu0 0
    %1814 = vmatmul.mubr.bf16.gmra.mrb[0].mxu0 %v1728
    %v1815 = vpop.f32.mrb[0].mxu0
    %v1816 = vadd.f32 %v1652, %v1815
    %v1817 = vpop.f32.mrb[0].mxu0
    %v1818 = vpop.f32.mrb[0].mxu0
    %v1819 = vadd.f32 %v1657, %v1818
    %v1820 = vpop.f32.mrb[0].mxu0
    %1821 = vmatprep.mubr.bf16.mxu0 0
    %1822 = vmatmul.mubr.bf16.gmra.mrb[0].mxu0 %v1731
    %v1823 = vpop.f32.mrb[0].mxu0
    %v1824 = vadd.f32 %v1662, %v1823
    %v1825 = vpop.f32.mrb[0].mxu0
    %v1826 = vpop.f32.mrb[0].mxu0
    %v1827 = vadd.f32 %v1667, %v1826
    %v1828 = vpop.f32.mrb[0].mxu0
    %1829 = vdwg.mxu0
    %v1830 = vpack.c.bf16 %v1771, %v1768
    %v1831 = vpack.c.bf16 %v1779, %v1776
    %v1832 = vpack.c.bf16 %v1787, %v1784
    %v1833 = vpack.c.bf16 %v1795, %v1792
    %v1834 = vpack.c.bf16 %v1803, %v1800
    %v1835 = vpack.c.bf16 %v1811, %v1808
    %v1836 = vpack.c.bf16 %v1819, %v1816
    %v1837 = vpack.c.bf16 %v1827, %v1824
    %v1838 = vmax.bf16 %v1830, 0
    %v1839 = vmax.bf16 %v1831, 0
    %v1840 = vmax.bf16 %v1832, 0
    %v1841 = vmax.bf16 %v1833, 0
    %v1842 = vmax.bf16 %v1834, 0
    %v1843 = vmax.bf16 %v1835, 0
    %v1844 = vmax.bf16 %v1836, 0
    %v1845 = vmax.bf16 %v1837, 0
    %s1846 = scalar_lea.vmem %s6, 32
    %v1847 = vld [vmem:[%s1846] sm:$0xf]
    %v1848 = vld [vmem:[%s1846 + $0x4] sm:$0xf]
    %v1849 = vld [vmem:[%s1846 + $0x8] sm:$0xf]
    %v1850 = vld [vmem:[%s1846 + $0xc] sm:$0xf]
    %v1851 = vld [vmem:[%s1846 + $0x10] sm:$0xf]
    %v1852 = vld [vmem:[%s1846 + $0x14] sm:$0xf]
    %v1853 = vld [vmem:[%s1846 + $0x18] sm:$0xf]
    %v1854 = vld [vmem:[%s1846 + $0x1c] sm:$0xf]
    %v1863 = vunpack.c.l.b16 %v1847
    %v1864 = vunpack.c.l.b16 %v1848
    %v1865 = vunpack.c.l.b16 %v1849
    %v1866 = vunpack.c.l.b16 %v1850
    %v1867 = vunpack.c.l.b16 %v1851
    %v1868 = vunpack.c.l.b16 %v1852
    %v1869 = vunpack.c.l.b16 %v1853
    %v1870 = vunpack.c.l.b16 %v1854
    %v1871 = vpack.c.b16 %v1864, %v1863
    %v1872 = vpack.c.b16 %v1866, %v1865
    %v1873 = vpack.c.b16 %v1868, %v1867
    %v1874 = vpack.c.b16 %v1870, %v1869
    %1879 = vmatprep.subr.bf16.mxu0 0
    %1880 = vmatpush1.bf16.msra.mxu0 %v1838
    %1881 = vmatprep.subr.bf16.mxu0 0
    %1882 = vmatpush1.bf16.msra.mxu0 %v1839
    %1883 = vmatprep.subr.bf16.mxu0 0
    %1884 = vmatpush1.bf16.msra.mxu0 %v1840
    %1885 = vmatprep.subr.bf16.mxu0 0
    %1886 = vmatpush1.bf16.msra.mxu0 %v1841
    %1887 = vmatprep.subr.bf16.mxu0 0
    %1888 = vmatpush1.bf16.msra.mxu0 %v1842
    %1889 = vmatprep.subr.bf16.mxu0 0
    %1890 = vmatpush1.bf16.msra.mxu0 %v1843
    %1891 = vmatprep.subr.bf16.mxu0 0
    %1892 = vmatpush1.bf16.msra.mxu0 %v1844
    %1893 = vmatprep.subr.bf16.mxu0 0
    %1894 = vmatpush1.bf16.msra.mxu0 %v1845
    %1895 = vmatprep.subr.bf16.mxu0 0
    %1896 = vmatpush1.bf16.msra.mxu0 0
    %1897 = vmatprep.subr.bf16.mxu0 0
    %1898 = vmatpush1.bf16.msra.mxu0 0
    %1899 = vmatprep.subr.bf16.mxu0 0
    %1900 = vmatpush1.bf16.msra.mxu0 0
    %1901 = vmatprep.subr.bf16.mxu0 0
    %1902 = vmatpush1.bf16.msra.mxu0 0
    %1903 = vmatprep.subr.bf16.mxu0 0
    %1904 = vmatpush1.bf16.msra.mxu0 0
    %1905 = vmatprep.subr.bf16.mxu0 0
    %1906 = vmatpush1.bf16.msra.mxu0 0
    %1907 = vmatprep.subr.bf16.mxu0 0
    %1908 = vmatpush1.bf16.msra.mxu0 0
    %1909 = vmatprep.subr.bf16.mxu0 0
    %1910 = vmatpush1.bf16.msra.mxu0 0
    %1911 = vmatprep.mubr.bf16.mxu0 0
    %1912 = vmatmul.mubr.bf16.gmra.mrb[0].mxu0 %v1871
    %v1913 = vpop.f32.mrb[0].mxu0
    %v1914 = vadd.f32 0.0, %v1913
    %v1915 = vpop.f32.mrb[0].mxu0
    %v1916 = vpop.f32.mrb[0].mxu0
    %v1917 = vadd.f32 0.0, %v1916
    %v1918 = vpop.f32.mrb[0].mxu0
    %1919 = vmatprep.mubr.bf16.mxu0 0
    %1920 = vmatmul.mubr.bf16.gmra.mrb[0].mxu0 %v1872
    %v1921 = vpop.f32.mrb[0].mxu0
    %v1922 = vadd.f32 0.0, %v1921
    %v1923 = vpop.f32.mrb[0].mxu0
    %v1924 = vpop.f32.mrb[0].mxu0
    %v1925 = vadd.f32 0.0, %v1924
    %v1926 = vpop.f32.mrb[0].mxu0
    %1927 = vmatprep.mubr.bf16.mxu0 0
    %1928 = vmatmul.mubr.bf16.gmra.mrb[0].mxu0 %v1873
    %v1929 = vpop.f32.mrb[0].mxu0
    %v1930 = vadd.f32 0.0, %v1929
    %v1931 = vpop.f32.mrb[0].mxu0
    %v1932 = vpop.f32.mrb[0].mxu0
    %v1933 = vadd.f32 0.0, %v1932
    %v1934 = vpop.f32.mrb[0].mxu0
    %1935 = vmatprep.mubr.bf16.mxu0 0
    %1936 = vmatmul.mubr.bf16.gmra.mrb[0].mxu0 %v1874
    %v1937 = vpop.f32.mrb[0].mxu0
    %v1938 = vadd.f32 0.0, %v1937
    %v1939 = vpop.f32.mrb[0].mxu0
    %v1940 = vpop.f32.mrb[0].mxu0
    %v1941 = vadd.f32 0.0, %v1940
    %v1942 = vpop.f32.mrb[0].mxu0
    %1943 = vdwg.mxu0
    %v1944 = vadd.f32 %v1543, %v1914
    %v1945 = vadd.f32 %v1544, %v1917
    %v1946 = vadd.f32 %v1545, %v1922
    %v1947 = vadd.f32 %v1546, %v1925
    %v1948 = vadd.f32 %v1547, %v1930
    %v1949 = vadd.f32 %v1548, %v1933
    %v1950 = vadd.f32 %v1549, %v1938
    %v1951 = vadd.f32 %v1550, %v1941
    %1953 = vset.pattern.permute.xlu0 0
    %1954 = vperm.xlu0 %1953, %v1201
    %v1955 = vpop.permute.xlu0 %1954
    %1958 = vset.pattern.permute.xlu0 0
    %1959 = vperm.xlu0 %1958, %v1202
    %v1960 = vpop.permute.xlu0 %1959
    %1963 = vset.pattern.permute.xlu0 0
    %1964 = vperm.xlu0 %1963, %v1203
    %v1965 = vpop.permute.xlu0 %1964
    %1968 = vset.pattern.permute.xlu0 0
    %1969 = vperm.xlu0 %1968, %v1204
    %v1970 = vpop.permute.xlu0 %1969
    %1973 = vset.pattern.permute.xlu0 0
    %1974 = vperm.xlu0 %1973, %v1205
    %v1975 = vpop.permute.xlu0 %1974
    %1978 = vset.pattern.permute.xlu0 0
    %1979 = vperm.xlu0 %1978, %v1206
    %v1980 = vpop.permute.xlu0 %1979
    %1983 = vset.pattern.permute.xlu0 0
    %1984 = vperm.xlu0 %1983, %v1207
    %v1985 = vpop.permute.xlu0 %1984
    %1988 = vset.pattern.permute.xlu0 0
    %1989 = vperm.xlu0 %1988, %v1208
    %v1990 = vpop.permute.xlu0 %1989
    %v1992 = vadd.f32 %v1944, %v1955
    %v1993 = vadd.f32 %v1945, %v1960
    %v1994 = vadd.f32 %v1946, %v1965
    %v1995 = vadd.f32 %v1947, %v1970
    %v1996 = vadd.f32 %v1948, %v1975
    %v1997 = vadd.f32 %v1949, %v1980
    %v1998 = vadd.f32 %v1950, %v1985
    %v1999 = vadd.f32 %v1951, %v1990
    %v2000 = vsel %vm123, %v1992, 0.0
    %v2001 = vsel %vm123, %v1993, 0.0
    %v2002 = vadd.f32 %v2000, %v2001
    %v2003 = vsel %vm123, %v1994, 0.0
    %v2004 = vadd.f32 %v2002, %v2003
    %v2005 = vsel %vm123, %v1995, 0.0
    %v2006 = vadd.f32 %v2004, %v2005
    %v2007 = vsel %vm123, %v1996, 0.0
    %v2008 = vadd.f32 %v2006, %v2007
    %v2009 = vsel %vm123, %v1997, 0.0
    %v2010 = vadd.f32 %v2008, %v2009
    %v2011 = vsel %vm123, %v1998, 0.0
    %v2012 = vadd.f32 %v2010, %v2011
    %v2013 = vsel %vm123, %v1999, 0.0
    %v2014 = vadd.f32 %v2012, %v2013
    %v2015 = vrot.slane %v2014, 4
    %v2016 = vadd.f32 %v2014, %v2015
    %v2017 = vrot.slane %v2016, 2
    %v2018 = vadd.f32 %v2016, %v2017
    %v2019 = vrot.slane %v2018, 1
    %v2020 = vadd.f32 %v2018, %v2019
    %v2021 = vmul.f32 %v2020, %v415
    %v2022 = vsub.f32 %v1992, %v2021
    %v2023 = vsub.f32 %v1993, %v2021
    %v2024 = vsub.f32 %v1994, %v2021
    %v2025 = vsub.f32 %v1995, %v2021
    %v2026 = vsub.f32 %v1996, %v2021
    %v2027 = vsub.f32 %v1997, %v2021
    %v2028 = vsub.f32 %v1998, %v2021
    %v2029 = vsub.f32 %v1999, %v2021
    %v2030 = vmul.f32 %v2022, %v2022
    %v2031 = vmul.f32 %v2023, %v2023
    %v2032 = vmul.f32 %v2024, %v2024
    %v2033 = vmul.f32 %v2025, %v2025
    %v2034 = vmul.f32 %v2026, %v2026
    %v2035 = vmul.f32 %v2027, %v2027
    %v2036 = vmul.f32 %v2028, %v2028
    %v2037 = vmul.f32 %v2029, %v2029
    %v2038 = vsel %vm123, %v2030, 0.0
    %v2039 = vsel %vm123, %v2031, 0.0
    %v2040 = vadd.f32 %v2038, %v2039
    %v2041 = vsel %vm123, %v2032, 0.0
    %v2042 = vadd.f32 %v2040, %v2041
    %v2043 = vsel %vm123, %v2033, 0.0
    %v2044 = vadd.f32 %v2042, %v2043
    %v2045 = vsel %vm123, %v2034, 0.0
    %v2046 = vadd.f32 %v2044, %v2045
    %v2047 = vsel %vm123, %v2035, 0.0
    %v2048 = vadd.f32 %v2046, %v2047
    %v2049 = vsel %vm123, %v2036, 0.0
    %v2050 = vadd.f32 %v2048, %v2049
    %v2051 = vsel %vm123, %v2037, 0.0
    %v2052 = vadd.f32 %v2050, %v2051
    %v2053 = vrot.slane %v2052, 4
    %v2054 = vadd.f32 %v2052, %v2053
    %v2055 = vrot.slane %v2054, 2
    %v2056 = vadd.f32 %v2054, %v2055
    %v2057 = vrot.slane %v2056, 1
    %v2058 = vadd.f32 %v2056, %v2057
    %v2059 = vmul.f32 %v2058, %v415
    %v2060 = vld [vmem:[%s8] sm:$0xff]
    %v2061 = vld [vmem:[%s8 + $0x8] sm:$0xff]
    %v2062 = vld [vmem:[%s8 + $0x10] sm:$0xff]
    %v2063 = vld [vmem:[%s8 + $0x18] sm:$0xff]
    %v2064 = vld [vmem:[%s8 + $0x20] sm:$0xff]
    %v2065 = vld [vmem:[%s8 + $0x28] sm:$0xff]
    %v2066 = vld [vmem:[%s8 + $0x30] sm:$0xff]
    %v2067 = vld [vmem:[%s8 + $0x38] sm:$0xff]
    %2069 = vset.pattern.permute.xlu0 0
    %2070 = vperm.xlu0 %2069, %v2060
    %v2071 = vpop.permute.xlu0 %2070
    %2074 = vset.pattern.permute.xlu0 0
    %2075 = vperm.xlu0 %2074, %v2061
    %v2076 = vpop.permute.xlu0 %2075
    %2079 = vset.pattern.permute.xlu0 0
    %2080 = vperm.xlu0 %2079, %v2062
    %v2081 = vpop.permute.xlu0 %2080
    %2084 = vset.pattern.permute.xlu0 0
    %2085 = vperm.xlu0 %2084, %v2063
    %v2086 = vpop.permute.xlu0 %2085
    %2089 = vset.pattern.permute.xlu0 0
    %2090 = vperm.xlu0 %2089, %v2064
    %v2091 = vpop.permute.xlu0 %2090
    %2094 = vset.pattern.permute.xlu0 0
    %2095 = vperm.xlu0 %2094, %v2065
    %v2096 = vpop.permute.xlu0 %2095
    %2099 = vset.pattern.permute.xlu0 0
    %2100 = vperm.xlu0 %2099, %v2066
    %v2101 = vpop.permute.xlu0 %2100
    %2104 = vset.pattern.permute.xlu0 0
    %2105 = vperm.xlu0 %2104, %v2067
    %v2106 = vpop.permute.xlu0 %2105
    %v2108 = vmul.f32 %v1992, %v2071
    %v2109 = vmul.f32 %v1993, %v2076
    %v2110 = vmul.f32 %v1994, %v2081
    %v2111 = vmul.f32 %v1995, %v2086
    %v2112 = vmul.f32 %v1996, %v2091
    %v2113 = vmul.f32 %v1997, %v2096
    %v2114 = vmul.f32 %v1998, %v2101
    %v2115 = vmul.f32 %v1999, %v2106
    %v2116 = vsel %vm123, %v2108, 0.0
    %v2117 = vsel %vm123, %v2109, 0.0
    %v2118 = vadd.f32 %v2116, %v2117
    %v2119 = vsel %vm123, %v2110, 0.0
    %v2120 = vadd.f32 %v2118, %v2119
    %v2121 = vsel %vm123, %v2111, 0.0
    %v2122 = vadd.f32 %v2120, %v2121
    %v2123 = vsel %vm123, %v2112, 0.0
    %v2124 = vadd.f32 %v2122, %v2123
    %v2125 = vsel %vm123, %v2113, 0.0
    %v2126 = vadd.f32 %v2124, %v2125
    %v2127 = vsel %vm123, %v2114, 0.0
    %v2128 = vadd.f32 %v2126, %v2127
    %v2129 = vsel %vm123, %v2115, 0.0
    %v2130 = vadd.f32 %v2128, %v2129
    %v2131 = vrot.slane %v2130, 4
    %v2132 = vadd.f32 %v2130, %v2131
    %v2133 = vrot.slane %v2132, 2
    %v2134 = vadd.f32 %v2132, %v2133
    %v2135 = vrot.slane %v2134, 1
    %v2136 = vadd.f32 %v2134, %v2135
    %v2137 = vadd.f32 %v2059, 1e-05
    %v2138 = vrsqrt.pop %v2137
    %v2139 = vmul.f32 %v2138, %v2136
    %v2140 = vld [vmem:[#allocation2] sm:$0x1]
    %2142 = vset.pattern.permute.xlu0 0
    %2143 = vperm.xlu0 %2142, %v2140
    %v2144 = vpop.permute.xlu0 %2143
    %v2146 = vlaneseq
    %v2147 = vshrl.u32 %v2146, 7
    %v2148 = vsub.s32 0, %v2147
    %v2149 = vrot.slane %v2144, %v2148
    %v2150 = vadd.f32 %v2139, %v2149
    %vm2151 = vcmask 122880
    %2152 = vst.msk [vmem:[#allocation3] sm:$0x1] %vm2151, %v2150
    // Predicated region
    $region42: #{tpu_custom_call.1} parent=1 // pred_check
      _
    $region43: #{tpu_custom_call.1} parent=1 // pred_check_branch
      %2154 = sbr.rel (0) target = $region45
    $region44: #{tpu_custom_call.1} parent=1 // pred_region
      %s2156 = ssub.s32 16, 16
      %2157 = vsyncadd [#allocation4], %s2156
      %s2159 = sshll.u32 [#allocation3], 4
      %s2160 = int_to_ptr.vmem [resolvable:$true] %s2159
      %2162 = dma.vmem_to_hbm [thread:$0]  %s2160, 16, %s10, [#allocation4]
    $region45: #{tpu_custom_call.1} parent=1 // pred_fallthru
      _
    // Predicated region
    $region46: #{tpu_custom_call.1} parent=1 // pred_check
      _
    $region47: #{tpu_custom_call.1} parent=1 // pred_check_branch
      %2164 = sbr.rel (0) target = $region49
    $region48: #{tpu_custom_call.1} parent=1 // pred_region
      %2165 = dma.done [#allocation4], 16
    $region49: #{tpu_custom_call.1} parent=1 // pred_fallthru
      _
    %2166 = vsyncpa [#allocation4], 1

</llo_original>
